<compile_context>
chip_gen: v6e
topology: v6e:2x2x1
jax: 0.10.0
libtpu: 0.0.40
codegen_flags: <defaults>
</compile_context>

<pallas_src>
import functools

import jax
import jax.numpy as jnp
from jax.experimental import pallas as pl
from jax.experimental.pallas import tpu as pltpu


# --------------------------- Phase 1: batched x-path projection ---------------------------
def _xproj_kernel(x_ref, w_ref, z_ref):
    # z = x @ [Wmx | Wx]   (bf16 operands, f32 accumulation)
    z_ref[...] = jnp.dot(x_ref[...], w_ref[...], preferred_element_type=jnp.float32)


# --------------------------- Phase 2: sequential mLSTM recurrence -------------------------
def _mlstm_seq_kernel(z_ref, h0_ref, c0_ref, wmh_ref, wh_ref, bh_ref,
                      hy_ref, cy_ref, h_scr, c_scr):
    t = pl.program_id(1)
    hsz = h0_ref.shape[-1]

    @pl.when(t == 0)
    def _():
        h_scr[...] = h0_ref[...]
        c_scr[...] = c0_ref[...]

    z = z_ref[0]            # [b, 5H] f32 : [x@Wmx | x@Wx] precomputed in phase 1
    hx = h_scr[...]         # [b, H]  f32 carried state
    cx = c_scr[...]         # [b, H]  f32 carried state

    # m = (x @ Wmx) * (hx @ Wmh)
    mh = jnp.dot(hx.astype(wmh_ref.dtype), wmh_ref[...],
                 preferred_element_type=jnp.float32)                       # [b, H]
    m = z[:, :hsz] * mh

    # gates = x @ Wx + m @ Wh + b_h     (gate order i, f, o, u)
    gates = (z[:, hsz:]
             + jnp.dot(m.astype(wh_ref.dtype), wh_ref[...],
                       preferred_element_type=jnp.float32)
             + bh_ref[...])                                                 # [b, 4H]

    i_g = jax.nn.sigmoid(gates[:, 0 * hsz:1 * hsz])
    f_g = jax.nn.sigmoid(gates[:, 1 * hsz:2 * hsz])
    o_g = jax.nn.sigmoid(gates[:, 2 * hsz:3 * hsz])
    u_g = jnp.tanh(gates[:, 3 * hsz:4 * hsz])

    cy = f_g * cx + i_g * u_g
    hy = o_g * jnp.tanh(cy)

    # carry state + emit per-step outputs
    h_scr[...] = hy
    c_scr[...] = cy
    hy_ref[0] = hy
    cy_ref[0] = cy


# --------------------------------------- wrapper -----------------------------------------
@functools.partial(jax.jit, static_argnames=("block_b",))
def mlstm_forward(data_seq, hidden, cell, wx, wh, bh, wmx, wmh, *, block_b=None):
    """Run the mLSTM cell over a sequence inside a single recurrent Pallas kernel.

    data_seq: [T, B, E]; hidden/cell: [B, H].
    Weights in (in, out) layout (PyTorch nn.Linear weight transposed):
      wx [E, 4H] (no bias), wh [H, 4H] with bias bh [1, 4H], wmx [E, H], wmh [H, H].
    Returns (hy_seq, cy_seq), each [T, B, H]; step t of the outputs equals the module's
    single-step forward applied to (data_seq[t], h_{t}, c_{t}).  T == 1 is exactly the
    module's forward.
    """
    t_len, bsz, e = data_seq.shape
    hsz = hidden.shape[-1]
    if block_b is None:
        block_b = bsz
    assert bsz % block_b == 0 and block_b % 8 == 0

    # ---- Phase 1: z = x @ [Wmx | Wx] as one batched GEMM (full MXU row occupancy) ----
    w_cat = jnp.concatenate([wmx, wx], axis=1).astype(jnp.bfloat16)        # [E, 5H]
    x_flat = data_seq.reshape(t_len * bsz, e).astype(jnp.bfloat16)         # [T*B, E]
    rows = t_len * bsz
    block_rows = rows if rows <= 512 else 512
    assert rows % block_rows == 0

    z_flat = pl.pallas_call(
        _xproj_kernel,
        out_shape=jax.ShapeDtypeStruct((rows, 5 * hsz), jnp.float32),
        grid=(rows // block_rows,),
        in_specs=[pl.BlockSpec((block_rows, e), lambda r: (r, 0)),
                  pl.BlockSpec((e, 5 * hsz), lambda r: (0, 0))],           # resident
        out_specs=pl.BlockSpec((block_rows, 5 * hsz), lambda r: (r, 0)),
        compiler_params=pltpu.CompilerParams(dimension_semantics=("parallel",)),
    )(x_flat, w_cat)
    z = z_flat.reshape(t_len, bsz, 5 * hsz)

    # ---- Phase 2: sequential recurrence; weights resident, h/c carried in VMEM scratch ----
    wmh_b = wmh.astype(jnp.bfloat16)
    wh_b = wh.astype(jnp.bfloat16)
    bh_f = bh.reshape(1, 4 * hsz).astype(jnp.float32)

    grid = (bsz // block_b, t_len)
    hy_seq, cy_seq = pl.pallas_call(
        _mlstm_seq_kernel,
        out_shape=(jax.ShapeDtypeStruct((t_len, bsz, hsz), jnp.float32),
                   jax.ShapeDtypeStruct((t_len, bsz, hsz), jnp.float32)),
        grid=grid,
        in_specs=[
            pl.BlockSpec((1, block_b, 5 * hsz), lambda b, t: (t, b, 0)),   # z[t]
            pl.BlockSpec((block_b, hsz), lambda b, t: (b, 0)),             # h0 (read at t==0)
            pl.BlockSpec((block_b, hsz), lambda b, t: (b, 0)),             # c0 (read at t==0)
            pl.BlockSpec((hsz, hsz), lambda b, t: (0, 0)),                 # Wmh (resident)
            pl.BlockSpec((hsz, 4 * hsz), lambda b, t: (0, 0)),             # Wh  (resident)
            pl.BlockSpec((1, 4 * hsz), lambda b, t: (0, 0)),               # b_h (resident)
        ],
        out_specs=(pl.BlockSpec((1, block_b, hsz), lambda b, t: (t, b, 0)),
                   pl.BlockSpec((1, block_b, hsz), lambda b, t: (t, b, 0))),
        scratch_shapes=[pltpu.VMEM((block_b, hsz), jnp.float32),           # h carry
                        pltpu.VMEM((block_b, hsz), jnp.float32)],          # c carry
        compiler_params=pltpu.CompilerParams(
            dimension_semantics=("parallel", "arbitrary")),
    )(z, hidden, cell, wmh_b, wh_b, bh_f)
    return hy_seq, cy_seq


# ---------------------------------- pure-JAX reference ------------------------------------
def _cell_reference(x, hx, cx, wx, wh, bh, wmx, wmh):
    """f32 reference for one step == the PyTorch module forward (layer_norm=False)."""
    hsz = hx.shape[-1]
    m = (x @ wmx) * (hx @ wmh)
    gates = x @ wx + m @ wh + bh
    i_g = jax.nn.sigmoid(gates[:, 0 * hsz:1 * hsz])
    f_g = jax.nn.sigmoid(gates[:, 1 * hsz:2 * hsz])
    o_g = jax.nn.sigmoid(gates[:, 2 * hsz:3 * hsz])
    u_g = jnp.tanh(gates[:, 3 * hsz:4 * hsz])
    cy = f_g * cx + i_g * u_g
    hy = o_g * jnp.tanh(cy)
    return hy, cy


def _sequence_reference(data_seq, h0, c0, wx, wh, bh, wmx, wmh):
    def step(carry, x):
        hx, cx = carry
        hy, cy = _cell_reference(x, hx, cx, wx, wh, bh, wmx, wmh)
        return (hy, cy), (hy, cy)
    (_, _), (hy_seq, cy_seq) = jax.lax.scan(step, (h0, c0), data_seq)
    return hy_seq, cy_seq


# ---------------------------------------- main --------------------------------------------
if __name__ == "__main__":
    T, B, E, H = 16, 8, 64, 128   # seq-len, batch, input_size, hidden_size

    key = jax.random.PRNGKey(0)
    ks = jax.random.split(key, 8)

    # Parameters in (in, out) layout (PyTorch nn.Linear weight transposed).
    wx = 0.1 * jax.random.normal(ks[0], (E, 4 * H), jnp.float32)    # Linear(E, 4H, bias=False)
    wh = 0.1 * jax.random.normal(ks[1], (H, 4 * H), jnp.float32)    # Linear(H, 4H, bias=True)
    bh = 0.1 * jax.random.normal(ks[2], (1, 4 * H), jnp.float32)
    wmx = 0.1 * jax.random.normal(ks[3], (E, H), jnp.float32)       # Linear(E, H, bias=False)
    wmh = 0.1 * jax.random.normal(ks[4], (H, H), jnp.float32)       # Linear(H, H, bias=False)

    data_seq = 0.5 * jax.random.normal(ks[5], (T, B, E), jnp.float32)
    hidden = 0.5 * jax.random.normal(ks[6], (B, H), jnp.float32)
    cell = 0.5 * jax.random.normal(ks[7], (B, H), jnp.float32)

    # Full-sequence run (recurrence internalized in one pallas_call).
    hy_seq, cy_seq = mlstm_forward(data_seq, hidden, cell, wx, wh, bh, wmx, wmh)
    jax.block_until_ready((hy_seq, cy_seq))

    ref_hy_seq, ref_cy_seq = _sequence_reference(data_seq, hidden, cell, wx, wh, bh, wmx, wmh)
    assert hy_seq.shape == (T, B, H) and cy_seq.shape == (T, B, H)
    # bf16 matmul path vs f32 reference -> loosened tolerance (expected precision loss).
    assert jnp.allclose(hy_seq, ref_hy_seq, atol=2e-2, rtol=2e-2)
    assert jnp.allclose(cy_seq, ref_cy_seq, atol=2e-2, rtol=2e-2)

    # Single-step run (T == 1) == the module's forward(data, hidden, cell) exactly.
    hy1, cy1 = mlstm_forward(data_seq[:1], hidden, cell, wx, wh, bh, wmx, wmh)
    jax.block_until_ready((hy1, cy1))
    ref_hy1, ref_cy1 = _cell_reference(data_seq[0], hidden, cell, wx, wh, bh, wmx, wmh)
    assert jnp.allclose(hy1[0], ref_hy1, atol=2e-2, rtol=2e-2)
    assert jnp.allclose(cy1[0], ref_cy1, atol=2e-2, rtol=2e-2)

    print("KERNEL_OK")
</pallas_src>

<mosaic_0001>
module attributes {stable_mosaic.version = 11 : i64} {
  func.func @_xproj_kernel(%arg0: i32, %arg1: memref<128x64xbf16, #tpu.memory_space<vmem>>, %arg2: memref<64x640xbf16, #tpu.memory_space<vmem>>, %arg3: memref<128x640xf32, #tpu.memory_space<vmem>>) attributes {dimension_semantics = [#tpu.dimension_semantics<parallel>], iteration_bounds = array<i64: 1>, scalar_prefetch = 0 : i64, scratch_operands = 0 : i64, tpu.core_type = #tpu.core_type<tc>, window_params = [{transform_indices = @transform_0, window_bounds = array<i64: 128, 64>}, {pipeline_mode = #tpu.pipeline_mode<synchronous>, transform_indices = @transform_1, window_bounds = array<i64: 64, 640>}, {transform_indices = @transform_2, window_bounds = array<i64: 128, 640>}]} {
    %c0 = arith.constant 0 : index
    %c0_0 = arith.constant 0 : index
    %0 = vector.load %arg1[%c0, %c0_0] : memref<128x64xbf16, #tpu.memory_space<vmem>>, vector<128x64xbf16>
    %c0_1 = arith.constant 0 : index
    %c0_2 = arith.constant 0 : index
    %1 = vector.load %arg2[%c0_1, %c0_2] : memref<64x640xbf16, #tpu.memory_space<vmem>>, vector<64x640xbf16>
    %cst = arith.constant dense<0.000000e+00> : vector<128x640xf32>
    %2 = tpu.matmul %0, %1, %cst {dimension_numbers = #tpu.dot_dimension_numbers<[1], [0], [0], [1], [0, 0, 1, 1], [], []>} : vector<128x64xbf16>, vector<64x640xbf16>, vector<128x640xf32> -> vector<128x640xf32>
    %c0_3 = arith.constant 0 : index
    %c0_4 = arith.constant 0 : index
    %3 = vector.load %arg3[%c0_3, %c0_4] : memref<128x640xf32, #tpu.memory_space<vmem>>, vector<128x640xf32>
    tpu.vector_store %arg3[%c0_3, %c0_4], %2 {strides = array<i32>} : memref<128x640xf32, #tpu.memory_space<vmem>>, vector<128x640xf32>,
    return
  }
  func.func @transform_0(%arg0: i32) -> (i32, i32) {
    %c0_i32 = arith.constant 0 : i32
    %c0_i32_0 = arith.constant 0 : i32
    return %arg0, %c0_i32 : i32, i32
  }
  func.func @transform_1(%arg0: i32) -> (i32, i32) {
    %c0_i32 = arith.constant 0 : i32
    %c0_i32_0 = arith.constant 0 : i32
    %c0_i32_1 = arith.constant 0 : i32
    return %c0_i32, %c0_i32_0 : i32, i32
  }
  func.func @transform_2(%arg0: i32) -> (i32, i32) {
    %c0_i32 = arith.constant 0 : i32
    %c0_i32_0 = arith.constant 0 : i32
    return %arg0, %c0_i32 : i32, i32
  }
}

module attributes {stable_mosaic.version = 11 : i64} {
  func.func @_mlstm_seq_kernel(%arg0: i32, %arg1: i32, %arg2: memref<1x8x640xf32, #tpu.memory_space<vmem>>, %arg3: memref<8x128xf32, #tpu.memory_space<vmem>>, %arg4: memref<8x128xf32, #tpu.memory_space<vmem>>, %arg5: memref<128x128xbf16, #tpu.memory_space<vmem>>, %arg6: memref<128x512xbf16, #tpu.memory_space<vmem>>, %arg7: memref<1x512xf32, #tpu.memory_space<vmem>>, %arg8: memref<1x8x128xf32, #tpu.memory_space<vmem>>, %arg9: memref<1x8x128xf32, #tpu.memory_space<vmem>>, %arg10: memref<8x128xf32, #tpu.memory_space<vmem>>, %arg11: memref<8x128xf32, #tpu.memory_space<vmem>>) attributes {dimension_semantics = [#tpu.dimension_semantics<parallel>, #tpu.dimension_semantics<arbitrary>], iteration_bounds = array<i64: 1, 16>, scalar_prefetch = 0 : i64, scratch_operands = 2 : i64, tpu.core_type = #tpu.core_type<tc>, window_params = [{transform_indices = @transform_0, window_bounds = array<i64: 1, 8, 640>}, {transform_indices = @transform_1, window_bounds = array<i64: 8, 128>}, {transform_indices = @transform_2, window_bounds = array<i64: 8, 128>}, {pipeline_mode = #tpu.pipeline_mode<synchronous>, transform_indices = @transform_3, window_bounds = array<i64: 128, 128>}, {pipeline_mode = #tpu.pipeline_mode<synchronous>, transform_indices = @transform_4, window_bounds = array<i64: 128, 512>}, {pipeline_mode = #tpu.pipeline_mode<synchronous>, transform_indices = @transform_5, window_bounds = array<i64: 1, 512>}, {transform_indices = @transform_6, window_bounds = array<i64: 1, 8, 128>}, {transform_indices = @transform_7, window_bounds = array<i64: 1, 8, 128>}]} {
    %c0_i32 = arith.constant 0 : i32
    %0 = arith.cmpi eq, %arg1, %c0_i32 : i32
    %1 = arith.extui %0 : i1 to i32
    %c0_i32_0 = arith.constant 0 : i32
    %2 = arith.cmpi ne, %1, %c0_i32_0 : i32
    scf.if %2 {
      %c0_27 = arith.constant 0 : index
      %c0_28 = arith.constant 0 : index
      %53 = vector.load %arg3[%c0_27, %c0_28] : memref<8x128xf32, #tpu.memory_space<vmem>>, vector<8x128xf32>
      %c0_29 = arith.constant 0 : index
      %c0_30 = arith.constant 0 : index
      %54 = vector.load %arg10[%c0_29, %c0_30] : memref<8x128xf32, #tpu.memory_space<vmem>>, vector<8x128xf32>
      tpu.vector_store %arg10[%c0_29, %c0_30], %53 {strides = array<i32>} : memref<8x128xf32, #tpu.memory_space<vmem>>, vector<8x128xf32>,
      %c0_31 = arith.constant 0 : index
      %c0_32 = arith.constant 0 : index
      %55 = vector.load %arg4[%c0_31, %c0_32] : memref<8x128xf32, #tpu.memory_space<vmem>>, vector<8x128xf32>
      %c0_33 = arith.constant 0 : index
      %c0_34 = arith.constant 0 : index
      %56 = vector.load %arg11[%c0_33, %c0_34] : memref<8x128xf32, #tpu.memory_space<vmem>>, vector<8x128xf32>
      tpu.vector_store %arg11[%c0_33, %c0_34], %55 {strides = array<i32>} : memref<8x128xf32, #tpu.memory_space<vmem>>, vector<8x128xf32>,
    } else {
    }
    %c0 = arith.constant 0 : index
    %c0_1 = arith.constant 0 : index
    %c0_2 = arith.constant 0 : index
    %3 = vector.load %arg2[%c0, %c0_1, %c0_2] : memref<1x8x640xf32, #tpu.memory_space<vmem>>, vector<1x8x640xf32>
    %4 = vector.shape_cast %3 : vector<1x8x640xf32> to vector<8x640xf32>
    %c0_3 = arith.constant 0 : index
    %c0_4 = arith.constant 0 : index
    %5 = vector.load %arg10[%c0_3, %c0_4] : memref<8x128xf32, #tpu.memory_space<vmem>>, vector<8x128xf32>
    %c0_5 = arith.constant 0 : index
    %c0_6 = arith.constant 0 : index
    %6 = vector.load %arg11[%c0_5, %c0_6] : memref<8x128xf32, #tpu.memory_space<vmem>>, vector<8x128xf32>
    %7 = arith.truncf %5 : vector<8x128xf32> to vector<8x128xbf16>
    %c0_7 = arith.constant 0 : index
    %c0_8 = arith.constant 0 : index
    %8 = vector.load %arg5[%c0_7, %c0_8] : memref<128x128xbf16, #tpu.memory_space<vmem>>, vector<128x128xbf16>
    %cst = arith.constant dense<0.000000e+00> : vector<8x128xf32>
    %9 = tpu.matmul %7, %8, %cst {dimension_numbers = #tpu.dot_dimension_numbers<[1], [0], [0], [1], [0, 0, 1, 1], [], []>} : vector<8x128xbf16>, vector<128x128xbf16>, vector<8x128xf32> -> vector<8x128xf32>
    %10 = vector.extract_strided_slice %4 {offsets = [0, 0], sizes = [8, 128], strides = [1, 1]} : vector<8x640xf32> to vector<8x128xf32>
    %11 = arith.mulf %10, %9 : vector<8x128xf32>
    %12 = vector.extract_strided_slice %4 {offsets = [0, 128], sizes = [8, 512], strides = [1, 1]} : vector<8x640xf32> to vector<8x512xf32>
    %13 = arith.truncf %11 : vector<8x128xf32> to vector<8x128xbf16>
    %c0_9 = arith.constant 0 : index
    %c0_10 = arith.constant 0 : index
    %14 = vector.load %arg6[%c0_9, %c0_10] : memref<128x512xbf16, #tpu.memory_space<vmem>>, vector<128x512xbf16>
    %cst_11 = arith.constant dense<0.000000e+00> : vector<8x512xf32>
    %15 = tpu.matmul %13, %14, %cst_11 {dimension_numbers = #tpu.dot_dimension_numbers<[1], [0], [0], [1], [0, 0, 1, 1], [], []>} : vector<8x128xbf16>, vector<128x512xbf16>, vector<8x512xf32> -> vector<8x512xf32>
    %16 = arith.addf %12, %15 : vector<8x512xf32>
    %c0_12 = arith.constant 0 : index
    %c0_13 = arith.constant 0 : index
    %17 = vector.load %arg7[%c0_12, %c0_13] : memref<1x512xf32, #tpu.memory_space<vmem>>, vector<1x512xf32>
    %18 = vector.broadcast %17 : vector<1x512xf32> to vector<8x512xf32>
    %19 = arith.addf %16, %18 : vector<8x512xf32>
    %20 = vector.extract_strided_slice %19 {offsets = [0, 0], sizes = [8, 128], strides = [1, 1]} : vector<8x512xf32> to vector<8x128xf32>
    %21 = arith.negf %20 : vector<8x128xf32>
    %22 = math.exp %21 : vector<8x128xf32>
    %cst_14 = arith.constant 1.000000e+00 : f32
    %23 = vector.broadcast %cst_14 : f32 to vector<8x128xf32>
    %24 = arith.addf %23, %22 : vector<8x128xf32>
    %25 = arith.divf %23, %24 : vector<8x128xf32>
    %26 = vector.extract_strided_slice %19 {offsets = [0, 128], sizes = [8, 128], strides = [1, 1]} : vector<8x512xf32> to vector<8x128xf32>
    %27 = arith.negf %26 : vector<8x128xf32>
    %28 = math.exp %27 : vector<8x128xf32>
    %cst_15 = arith.constant 1.000000e+00 : f32
    %29 = vector.broadcast %cst_15 : f32 to vector<8x128xf32>
    %30 = arith.addf %29, %28 : vector<8x128xf32>
    %31 = arith.divf %29, %30 : vector<8x128xf32>
    %32 = vector.extract_strided_slice %19 {offsets = [0, 256], sizes = [8, 128], strides = [1, 1]} : vector<8x512xf32> to vector<8x128xf32>
    %33 = arith.negf %32 : vector<8x128xf32>
    %34 = math.exp %33 : vector<8x128xf32>
    %cst_16 = arith.constant 1.000000e+00 : f32
    %35 = vector.broadcast %cst_16 : f32 to vector<8x128xf32>
    %36 = arith.addf %35, %34 : vector<8x128xf32>
    %37 = arith.divf %35, %36 : vector<8x128xf32>
    %38 = vector.extract_strided_slice %19 {offsets = [0, 384], sizes = [8, 128], strides = [1, 1]} : vector<8x512xf32> to vector<8x128xf32>
    %39 = math.tanh %38 : vector<8x128xf32>
    %40 = arith.mulf %31, %6 : vector<8x128xf32>
    %41 = arith.mulf %25, %39 : vector<8x128xf32>
    %42 = arith.addf %40, %41 : vector<8x128xf32>
    %43 = math.tanh %42 : vector<8x128xf32>
    %44 = arith.mulf %37, %43 : vector<8x128xf32>
    %c0_17 = arith.constant 0 : index
    %c0_18 = arith.constant 0 : index
    %45 = vector.load %arg10[%c0_17, %c0_18] : memref<8x128xf32, #tpu.memory_space<vmem>>, vector<8x128xf32>
    tpu.vector_store %arg10[%c0_17, %c0_18], %44 {strides = array<i32>} : memref<8x128xf32, #tpu.memory_space<vmem>>, vector<8x128xf32>,
    %c0_19 = arith.constant 0 : index
    %c0_20 = arith.constant 0 : index
    %46 = vector.load %arg11[%c0_19, %c0_20] : memref<8x128xf32, #tpu.memory_space<vmem>>, vector<8x128xf32>
    tpu.vector_store %arg11[%c0_19, %c0_20], %42 {strides = array<i32>} : memref<8x128xf32, #tpu.memory_space<vmem>>, vector<8x128xf32>,
    %c0_21 = arith.constant 0 : index
    %c0_22 = arith.constant 0 : index
    %c0_23 = arith.constant 0 : index
    %47 = vector.load %arg8[%c0_21, %c0_22, %c0_23] : memref<1x8x128xf32, #tpu.memory_space<vmem>>, vector<1x8x128xf32>
    %48 = vector.shape_cast %47 : vector<1x8x128xf32> to vector<8x128xf32>
    %49 = vector.shape_cast %44 : vector<8x128xf32> to vector<1x8x128xf32>
    tpu.vector_store %arg8[%c0_21, %c0_22, %c0_23], %49 {strides = array<i32>} : memref<1x8x128xf32, #tpu.memory_space<vmem>>, vector<1x8x128xf32>,
    %c0_24 = arith.constant 0 : index
    %c0_25 = arith.constant 0 : index
    %c0_26 = arith.constant 0 : index
    %50 = vector.load %arg9[%c0_24, %c0_25, %c0_26] : memref<1x8x128xf32, #tpu.memory_space<vmem>>, vector<1x8x128xf32>
    %51 = vector.shape_cast %50 : vector<1x8x128xf32> to vector<8x128xf32>
    %52 = vector.shape_cast %42 : vector<8x128xf32> to vector<1x8x128xf32>
    tpu.vector_store %arg9[%c0_24, %c0_25, %c0_26], %52 {strides = array<i32>} : memref<1x8x128xf32, #tpu.memory_space<vmem>>, vector<1x8x128xf32>,
    return
  }
  func.func @transform_0(%arg0: i32, %arg1: i32) -> (i32, i32, i32) {
    %c0_i32 = arith.constant 0 : i32
    %c0_i32_0 = arith.constant 0 : i32
    return %arg1, %arg0, %c0_i32 : i32, i32, i32
  }
  func.func @transform_1(%arg0: i32, %arg1: i32) -> (i32, i32) {
    %c0_i32 = arith.constant 0 : i32
    %c0_i32_0 = arith.constant 0 : i32
    return %arg0, %c0_i32 : i32, i32
  }
  func.func @transform_2(%arg0: i32, %arg1: i32) -> (i32, i32) {
    %c0_i32 = arith.constant 0 : i32
    %c0_i32_0 = arith.constant 0 : i32
    return %arg0, %c0_i32 : i32, i32
  }
  func.func @transform_3(%arg0: i32, %arg1: i32) -> (i32, i32) {
    %c0_i32 = arith.constant 0 : i32
    %c0_i32_0 = arith.constant 0 : i32
    %c0_i32_1 = arith.constant 0 : i32
    return %c0_i32, %c0_i32_0 : i32, i32
  }
  func.func @transform_4(%arg0: i32, %arg1: i32) -> (i32, i32) {
    %c0_i32 = arith.constant 0 : i32
    %c0_i32_0 = arith.constant 0 : i32
    %c0_i32_1 = arith.constant 0 : i32
    return %c0_i32, %c0_i32_0 : i32, i32
  }
  func.func @transform_5(%arg0: i32, %arg1: i32) -> (i32, i32) {
    %c0_i32 = arith.constant 0 : i32
    %c0_i32_0 = arith.constant 0 : i32
    %c0_i32_1 = arith.constant 0 : i32
    return %c0_i32, %c0_i32_0 : i32, i32
  }
  func.func @transform_6(%arg0: i32, %arg1: i32) -> (i32, i32, i32) {
    %c0_i32 = arith.constant 0 : i32
    %c0_i32_0 = arith.constant 0 : i32
    return %arg1, %arg0, %c0_i32 : i32, i32, i32
  }
  func.func @transform_7(%arg0: i32, %arg1: i32) -> (i32, i32, i32) {
    %c0_i32 = arith.constant 0 : i32
    %c0_i32_0 = arith.constant 0 : i32
    return %arg1, %arg0, %c0_i32 : i32, i32, i32
  }
}

</mosaic_0001>

<llo_original>
// kernel: mlstm_forward.2
$region0: #{mlstm_forward.2}
  #allocation0 [shape = 'u32[]', space=smem, size = 0x4, offset = 0x4, fixed_abs, tag = 'smem constant byte address 0x4 - core index']
  #allocation1 [shape = 'u32[144,128]{1,0:T(1,128)}', space=vmem, size = 0x12000, scoped, tag = 'internal scratch']
  %s0 = inlined_call_operand.vmem [shape: bf16[128,64], index: 0, kind: input, shape index: {}]
  %s1 = inlined_call_operand.vmem [shape: bf16[64,640], index: 1, kind: input, shape index: {}]
  %s2 = inlined_call_operand.vmem [shape: f32[128,640], index: 2, kind: output, shape index: {}]
  %s3 = sld [smem:[#allocation0]]
  $region18: #{mlstm_forward.2} parent=0
    _
  %s5 = ssub.s32 1, %s3
  %s6 = scalar_select 0, %s5, %s3
  // Predicated region
  $region2: #{mlstm_forward.2} parent=0 // pred_check
    _
  $region3: #{mlstm_forward.2} parent=0 // pred_check_branch
    %8 = sbr.rel (0) target = $region5
  $region4: #{mlstm_forward.2} parent=0 // pred_region
    _
  $region5: #{mlstm_forward.2} parent=0 // pred_fallthru
    _
  // Predicated region
  $region6: #{mlstm_forward.2} parent=0 // pred_check
    _
  $region7: #{mlstm_forward.2} parent=0 // pred_check_branch
    %10 = sbr.rel (0) target = $region9
  $region8: #{mlstm_forward.2} parent=0 // pred_region
    _
  $region9: #{mlstm_forward.2} parent=0 // pred_fallthru
    _
  %v12 = vld [vmem:[%s0] sm:$0xf]
  %v13 = vld [vmem:[%s0 + $0x4] sm:$0xf]
  %v14 = vld [vmem:[%s0 + $0x8] sm:$0xf]
  %v15 = vld [vmem:[%s0 + $0xc] sm:$0xf]
  %v16 = vld [vmem:[%s0 + $0x10] sm:$0xf]
  %v17 = vld [vmem:[%s0 + $0x14] sm:$0xf]
  %v18 = vld [vmem:[%s0 + $0x18] sm:$0xf]
  %v19 = vld [vmem:[%s0 + $0x1c] sm:$0xf]
  %v20 = vld [vmem:[%s0 + $0x20] sm:$0xf]
  %v21 = vld [vmem:[%s0 + $0x24] sm:$0xf]
  %v22 = vld [vmem:[%s0 + $0x28] sm:$0xf]
  %v23 = vld [vmem:[%s0 + $0x2c] sm:$0xf]
  %v24 = vld [vmem:[%s0 + $0x30] sm:$0xf]
  %v25 = vld [vmem:[%s0 + $0x34] sm:$0xf]
  %v26 = vld [vmem:[%s0 + $0x38] sm:$0xf]
  %v27 = vld [vmem:[%s0 + $0x3c] sm:$0xf]
  %v28 = vld [vmem:[%s1] sm:$0xff]
  %v29 = vld [vmem:[%s1 + $0x8] sm:$0xff]
  %v30 = vld [vmem:[%s1 + $0x10] sm:$0xf]
  %v31 = vld [vmem:[%s1 + $0x14] sm:$0xff]
  %v32 = vld [vmem:[%s1 + $0x1c] sm:$0xff]
  %v33 = vld [vmem:[%s1 + $0x24] sm:$0xf]
  %v34 = vld [vmem:[%s1 + $0x28] sm:$0xff]
  %v35 = vld [vmem:[%s1 + $0x30] sm:$0xff]
  %v36 = vld [vmem:[%s1 + $0x38] sm:$0xf]
  %v37 = vld [vmem:[%s1 + $0x3c] sm:$0xff]
  %v38 = vld [vmem:[%s1 + $0x44] sm:$0xff]
  %v39 = vld [vmem:[%s1 + $0x4c] sm:$0xf]
  %v40 = vld [vmem:[%s1 + $0x50] sm:$0xff]
  %v41 = vld [vmem:[%s1 + $0x58] sm:$0xff]
  %v42 = vld [vmem:[%s1 + $0x60] sm:$0xf]
  %v43 = vld [vmem:[%s1 + $0x64] sm:$0xff]
  %v44 = vld [vmem:[%s1 + $0x6c] sm:$0xff]
  %v45 = vld [vmem:[%s1 + $0x74] sm:$0xf]
  %v46 = vld [vmem:[%s1 + $0x78] sm:$0xff]
  %v47 = vld [vmem:[%s1 + $0x80] sm:$0xff]
  %v48 = vld [vmem:[%s1 + $0x88] sm:$0xf]
  %v49 = vld [vmem:[%s1 + $0x8c] sm:$0xff]
  %v50 = vld [vmem:[%s1 + $0x94] sm:$0xff]
  %v51 = vld [vmem:[%s1 + $0x9c] sm:$0xf]
  %v68 = vunpack.c.l.b16 %v12
  %v69 = vunpack.c.l.b16 %v13
  %v70 = vunpack.c.l.b16 %v14
  %v71 = vunpack.c.l.b16 %v15
  %v72 = vunpack.c.l.b16 %v16
  %v73 = vunpack.c.l.b16 %v17
  %v74 = vunpack.c.l.b16 %v18
  %v75 = vunpack.c.l.b16 %v19
  %v76 = vunpack.c.l.b16 %v20
  %v77 = vunpack.c.l.b16 %v21
  %v78 = vunpack.c.l.b16 %v22
  %v79 = vunpack.c.l.b16 %v23
  %v80 = vunpack.c.l.b16 %v24
  %v81 = vunpack.c.l.b16 %v25
  %v82 = vunpack.c.l.b16 %v26
  %v83 = vunpack.c.l.b16 %v27
  %v84 = vpack.c.b16 %v69, %v68
  %v85 = vpack.c.b16 %v71, %v70
  %v86 = vpack.c.b16 %v73, %v72
  %v87 = vpack.c.b16 %v75, %v74
  %v88 = vpack.c.b16 %v77, %v76
  %v89 = vpack.c.b16 %v79, %v78
  %v90 = vpack.c.b16 %v81, %v80
  %v91 = vpack.c.b16 %v83, %v82
  %v116 = vunpack.c.l.b16 %v28
  %v117 = vunpack.c.h.b16 %v28
  %v118 = vunpack.c.l.b16 %v29
  %v119 = vunpack.c.h.b16 %v29
  %v120 = vunpack.c.l.b16 %v30
  %v121 = vunpack.c.l.b16 %v31
  %v122 = vunpack.c.h.b16 %v31
  %v123 = vunpack.c.l.b16 %v32
  %v124 = vunpack.c.h.b16 %v32
  %v125 = vunpack.c.l.b16 %v33
  %v126 = vunpack.c.l.b16 %v34
  %v127 = vunpack.c.h.b16 %v34
  %v128 = vunpack.c.l.b16 %v35
  %v129 = vunpack.c.h.b16 %v35
  %v130 = vunpack.c.l.b16 %v36
  %v131 = vunpack.c.l.b16 %v37
  %v132 = vunpack.c.h.b16 %v37
  %v133 = vunpack.c.l.b16 %v38
  %v134 = vunpack.c.h.b16 %v38
  %v135 = vunpack.c.l.b16 %v39
  %v136 = vunpack.c.l.b16 %v40
  %v137 = vunpack.c.h.b16 %v40
  %v138 = vunpack.c.l.b16 %v41
  %v139 = vunpack.c.h.b16 %v41
  %v140 = vunpack.c.l.b16 %v42
  %v141 = vunpack.c.l.b16 %v43
  %v142 = vunpack.c.h.b16 %v43
  %v143 = vunpack.c.l.b16 %v44
  %v144 = vunpack.c.h.b16 %v44
  %v145 = vunpack.c.l.b16 %v45
  %v146 = vunpack.c.l.b16 %v46
  %v147 = vunpack.c.h.b16 %v46
  %v148 = vunpack.c.l.b16 %v47
  %v149 = vunpack.c.h.b16 %v47
  %v150 = vunpack.c.l.b16 %v48
  %v151 = vunpack.c.l.b16 %v49
  %v152 = vunpack.c.h.b16 %v49
  %v153 = vunpack.c.l.b16 %v50
  %v154 = vunpack.c.h.b16 %v50
  %v155 = vunpack.c.l.b16 %v51
  %v156 = vpack.c.b16 %v121, %v116
  %v157 = vpack.c.b16 %v122, %v117
  %v158 = vpack.c.b16 %v123, %v118
  %v159 = vpack.c.b16 %v124, %v119
  %v160 = vpack.c.b16 %v125, %v120
  %v161 = vpack.c.b16 %v131, %v126
  %v162 = vpack.c.b16 %v132, %v127
  %v163 = vpack.c.b16 %v133, %v128
  %v164 = vpack.c.b16 %v134, %v129
  %v165 = vpack.c.b16 %v135, %v130
  %v166 = vpack.c.b16 %v141, %v136
  %v167 = vpack.c.b16 %v142, %v137
  %v168 = vpack.c.b16 %v143, %v138
  %v169 = vpack.c.b16 %v144, %v139
  %v170 = vpack.c.b16 %v145, %v140
  %v171 = vpack.c.b16 %v151, %v146
  %v172 = vpack.c.b16 %v152, %v147
  %v173 = vpack.c.b16 %v153, %v148
  %v174 = vpack.c.b16 %v154, %v149
  %v175 = vpack.c.b16 %v155, %v150
  %vm196 = vcmask 523264
  %v198 = vsel %vm196, %v84, 0
  %v201 = vsel %vm196, %v85, 0
  %v204 = vsel %vm196, %v86, 0
  %v207 = vsel %vm196, %v87, 0
  %v210 = vsel %vm196, %v88, 0
  %v213 = vsel %vm196, %v89, 0
  %v216 = vsel %vm196, %v90, 0
  %v219 = vsel %vm196, %v91, 0
  %221 = vmatprep.subr.bf16.mxu0 0
  %222 = vmatpush1.bf16.msra.mxu0 0
  %223 = vmatprep.subr.bf16.mxu0 0
  %224 = vmatpush1.bf16.msra.mxu0 0
  %225 = vmatprep.subr.bf16.mxu0 0
  %226 = vmatpush1.bf16.msra.mxu0 0
  %227 = vmatprep.subr.bf16.mxu0 0
  %228 = vmatpush1.bf16.msra.mxu0 0
  %229 = vmatprep.subr.bf16.mxu0 %v172
  %230 = vmatpush1.bf16.msra.mxu0 %v171
  %231 = vmatprep.subr.bf16.mxu0 %v167
  %232 = vmatpush1.bf16.msra.mxu0 %v166
  %233 = vmatprep.subr.bf16.mxu0 %v162
  %234 = vmatpush1.bf16.msra.mxu0 %v161
  %235 = vmatprep.subr.bf16.mxu0 %v157
  %236 = vmatpush1.bf16.msra.mxu0 %v156
  %237 = vmatprep.subr.bf16.mxu0 0
  %238 = vmatpush2.bf16.msra.mxu0 0
  %239 = vmatprep.subr.bf16.mxu0 0
  %240 = vmatpush2.bf16.msra.mxu0 0
  %241 = vmatprep.subr.bf16.mxu0 0
  %242 = vmatpush2.bf16.msra.mxu0 0
  %243 = vmatprep.subr.bf16.mxu0 0
  %244 = vmatpush2.bf16.msra.mxu0 0
  %245 = vmatprep.subr.bf16.mxu0 0
  %246 = vmatpush2.bf16.msra.mxu0 0
  %247 = vmatprep.subr.bf16.mxu0 0
  %248 = vmatpush2.bf16.msra.mxu0 0
  %249 = vmatprep.subr.bf16.mxu0 0
  %250 = vmatpush2.bf16.msra.mxu0 0
  %251 = vmatprep.subr.bf16.mxu0 0
  %252 = vmatpush2.bf16.msra.mxu0 0
  %253 = vmatprep.mubr.bf16.mxu0 0
  %254 = vmatmul.mubr.bf16.gmra.mxu0 %v198
  %v255 = vpop.f32.mrf.mxu0
  %v256 = vadd.f32 0.0, %v255
  %v257 = vpop.f32.mrf.mxu0
  %v258 = vadd.f32 0.0, %v257
  %v259 = vpop.f32.mrf.mxu0
  %v260 = vadd.f32 0.0, %v259
  %v261 = vpop.f32.mrf.mxu0
  %v262 = vadd.f32 0.0, %v261
  %263 = vmatprep.mubr.bf16.mxu0 0
  %264 = vmatmul.mubr.bf16.gmra.mxu0 %v201
  %v265 = vpop.f32.mrf.mxu0
  %v266 = vadd.f32 0.0, %v265
  %v267 = vpop.f32.mrf.mxu0
  %v268 = vadd.f32 0.0, %v267
  %v269 = vpop.f32.mrf.mxu0
  %v270 = vadd.f32 0.0, %v269
  %v271 = vpop.f32.mrf.mxu0
  %v272 = vadd.f32 0.0, %v271
  %273 = vmatprep.mubr.bf16.mxu0 0
  %274 = vmatmul.mubr.bf16.gmra.mxu0 %v204
  %v275 = vpop.f32.mrf.mxu0
  %v276 = vadd.f32 0.0, %v275
  %v277 = vpop.f32.mrf.mxu0
  %v278 = vadd.f32 0.0, %v277
  %v279 = vpop.f32.mrf.mxu0
  %v280 = vadd.f32 0.0, %v279
  %v281 = vpop.f32.mrf.mxu0
  %v282 = vadd.f32 0.0, %v281
  %283 = vmatprep.mubr.bf16.mxu0 0
  %284 = vmatmul.mubr.bf16.gmra.mxu0 %v207
  %v285 = vpop.f32.mrf.mxu0
  %v286 = vadd.f32 0.0, %v285
  %v287 = vpop.f32.mrf.mxu0
  %v288 = vadd.f32 0.0, %v287
  %v289 = vpop.f32.mrf.mxu0
  %v290 = vadd.f32 0.0, %v289
  %v291 = vpop.f32.mrf.mxu0
  %v292 = vadd.f32 0.0, %v291
  %293 = vmatprep.mubr.bf16.mxu0 0
  %294 = vmatmul.mubr.bf16.gmra.mxu0 %v210
  %v295 = vpop.f32.mrf.mxu0
  %v296 = vadd.f32 0.0, %v295
  %v297 = vpop.f32.mrf.mxu0
  %v298 = vadd.f32 0.0, %v297
  %v299 = vpop.f32.mrf.mxu0
  %v300 = vadd.f32 0.0, %v299
  %v301 = vpop.f32.mrf.mxu0
  %v302 = vadd.f32 0.0, %v301
  %303 = vmatprep.mubr.bf16.mxu0 0
  %304 = vmatmul.mubr.bf16.gmra.mxu0 %v213
  %v305 = vpop.f32.mrf.mxu0
  %v306 = vadd.f32 0.0, %v305
  %v307 = vpop.f32.mrf.mxu0
  %v308 = vadd.f32 0.0, %v307
  %v309 = vpop.f32.mrf.mxu0
  %v310 = vadd.f32 0.0, %v309
  %v311 = vpop.f32.mrf.mxu0
  %v312 = vadd.f32 0.0, %v311
  %313 = vmatprep.mubr.bf16.mxu0 0
  %314 = vmatmul.mubr.bf16.gmra.mxu0 %v216
  %v315 = vpop.f32.mrf.mxu0
  %v316 = vadd.f32 0.0, %v315
  %v317 = vpop.f32.mrf.mxu0
  %v318 = vadd.f32 0.0, %v317
  %v319 = vpop.f32.mrf.mxu0
  %v320 = vadd.f32 0.0, %v319
  %v321 = vpop.f32.mrf.mxu0
  %v322 = vadd.f32 0.0, %v321
  %323 = vmatprep.mubr.bf16.mxu0 0
  %324 = vmatmul.mubr.bf16.gmra.mxu0 %v219
  %v325 = vpop.f32.mrf.mxu0
  %v326 = vadd.f32 0.0, %v325
  %v327 = vpop.f32.mrf.mxu0
  %v328 = vadd.f32 0.0, %v327
  %v329 = vpop.f32.mrf.mxu0
  %v330 = vadd.f32 0.0, %v329
  %v331 = vpop.f32.mrf.mxu0
  %v332 = vadd.f32 0.0, %v331
  %333 = vdwg.mxu0
  %334 = vmatprep.subr.bf16.mxu0 0
  %335 = vmatpush1.bf16.msra.mxu0 0
  %336 = vmatprep.subr.bf16.mxu0 0
  %337 = vmatpush1.bf16.msra.mxu0 0
  %338 = vmatprep.subr.bf16.mxu0 0
  %339 = vmatpush1.bf16.msra.mxu0 0
  %340 = vmatprep.subr.bf16.mxu0 0
  %341 = vmatpush1.bf16.msra.mxu0 0
  %342 = vmatprep.subr.bf16.mxu0 %v174
  %343 = vmatpush1.bf16.msra.mxu0 %v173
  %344 = vmatprep.subr.bf16.mxu0 %v169
  %345 = vmatpush1.bf16.msra.mxu0 %v168
  %346 = vmatprep.subr.bf16.mxu0 %v164
  %347 = vmatpush1.bf16.msra.mxu0 %v163
  %348 = vmatprep.subr.bf16.mxu0 %v159
  %349 = vmatpush1.bf16.msra.mxu0 %v158
  %350 = vmatprep.subr.bf16.mxu0 0
  %351 = vmatpush2.bf16.msra.mxu0 0
  %352 = vmatprep.subr.bf16.mxu0 0
  %353 = vmatpush2.bf16.msra.mxu0 0
  %354 = vmatprep.subr.bf16.mxu0 0
  %355 = vmatpush2.bf16.msra.mxu0 0
  %356 = vmatprep.subr.bf16.mxu0 0
  %357 = vmatpush2.bf16.msra.mxu0 0
  %358 = vmatprep.subr.bf16.mxu0 0
  %359 = vmatpush2.bf16.msra.mxu0 0
  %360 = vmatprep.subr.bf16.mxu0 0
  %361 = vmatpush2.bf16.msra.mxu0 0
  %362 = vmatprep.subr.bf16.mxu0 0
  %363 = vmatpush2.bf16.msra.mxu0 0
  %364 = vmatprep.subr.bf16.mxu0 0
  %365 = vmatpush2.bf16.msra.mxu0 0
  %366 = vmatprep.mubr.bf16.mxu0 0
  %367 = vmatmul.mubr.bf16.gmra.mxu0 %v198
  %v368 = vpop.f32.mrf.mxu0
  %v369 = vadd.f32 0.0, %v368
  %v370 = vpop.f32.mrf.mxu0
  %v371 = vadd.f32 0.0, %v370
  %v372 = vpop.f32.mrf.mxu0
  %v373 = vadd.f32 0.0, %v372
  %v374 = vpop.f32.mrf.mxu0
  %v375 = vadd.f32 0.0, %v374
  %376 = vmatprep.mubr.bf16.mxu0 0
  %377 = vmatmul.mubr.bf16.gmra.mxu0 %v201
  %v378 = vpop.f32.mrf.mxu0
  %v379 = vadd.f32 0.0, %v378
  %v380 = vpop.f32.mrf.mxu0
  %v381 = vadd.f32 0.0, %v380
  %v382 = vpop.f32.mrf.mxu0
  %v383 = vadd.f32 0.0, %v382
  %v384 = vpop.f32.mrf.mxu0
  %v385 = vadd.f32 0.0, %v384
  %386 = vmatprep.mubr.bf16.mxu0 0
  %387 = vmatmul.mubr.bf16.gmra.mxu0 %v204
  %v388 = vpop.f32.mrf.mxu0
  %v389 = vadd.f32 0.0, %v388
  %v390 = vpop.f32.mrf.mxu0
  %v391 = vadd.f32 0.0, %v390
  %v392 = vpop.f32.mrf.mxu0
  %v393 = vadd.f32 0.0, %v392
  %v394 = vpop.f32.mrf.mxu0
  %v395 = vadd.f32 0.0, %v394
  %396 = vmatprep.mubr.bf16.mxu0 0
  %397 = vmatmul.mubr.bf16.gmra.mxu0 %v207
  %v398 = vpop.f32.mrf.mxu0
  %v399 = vadd.f32 0.0, %v398
  %v400 = vpop.f32.mrf.mxu0
  %v401 = vadd.f32 0.0, %v400
  %v402 = vpop.f32.mrf.mxu0
  %v403 = vadd.f32 0.0, %v402
  %v404 = vpop.f32.mrf.mxu0
  %v405 = vadd.f32 0.0, %v404
  %406 = vmatprep.mubr.bf16.mxu0 0
  %407 = vmatmul.mubr.bf16.gmra.mxu0 %v210
  %v408 = vpop.f32.mrf.mxu0
  %v409 = vadd.f32 0.0, %v408
  %v410 = vpop.f32.mrf.mxu0
  %v411 = vadd.f32 0.0, %v410
  %v412 = vpop.f32.mrf.mxu0
  %v413 = vadd.f32 0.0, %v412
  %v414 = vpop.f32.mrf.mxu0
  %v415 = vadd.f32 0.0, %v414
  %416 = vmatprep.mubr.bf16.mxu0 0
  %417 = vmatmul.mubr.bf16.gmra.mxu0 %v213
  %v418 = vpop.f32.mrf.mxu0
  %v419 = vadd.f32 0.0, %v418
  %v420 = vpop.f32.mrf.mxu0
  %v421 = vadd.f32 0.0, %v420
  %v422 = vpop.f32.mrf.mxu0
  %v423 = vadd.f32 0.0, %v422
  %v424 = vpop.f32.mrf.mxu0
  %v425 = vadd.f32 0.0, %v424
  %426 = vmatprep.mubr.bf16.mxu0 0
  %427 = vmatmul.mubr.bf16.gmra.mxu0 %v216
  %v428 = vpop.f32.mrf.mxu0
  %v429 = vadd.f32 0.0, %v428
  %v430 = vpop.f32.mrf.mxu0
  %v431 = vadd.f32 0.0, %v430
  %v432 = vpop.f32.mrf.mxu0
  %v433 = vadd.f32 0.0, %v432
  %v434 = vpop.f32.mrf.mxu0
  %v435 = vadd.f32 0.0, %v434
  %436 = vmatprep.mubr.bf16.mxu0 0
  %437 = vmatmul.mubr.bf16.gmra.mxu0 %v219
  %v438 = vpop.f32.mrf.mxu0
  %v439 = vadd.f32 0.0, %v438
  %v440 = vpop.f32.mrf.mxu0
  %v441 = vadd.f32 0.0, %v440
  %v442 = vpop.f32.mrf.mxu0
  %v443 = vadd.f32 0.0, %v442
  %v444 = vpop.f32.mrf.mxu0
  %v445 = vadd.f32 0.0, %v444
  %446 = vdwg.mxu0
  %447 = vmatprep.subr.bf16.mxu0 0
  %448 = vmatpush1.bf16.msra.mxu0 0
  %449 = vmatprep.subr.bf16.mxu0 0
  %450 = vmatpush1.bf16.msra.mxu0 0
  %451 = vmatprep.subr.bf16.mxu0 0
  %452 = vmatpush1.bf16.msra.mxu0 0
  %453 = vmatprep.subr.bf16.mxu0 0
  %454 = vmatpush1.bf16.msra.mxu0 0
  %455 = vmatprep.subr.bf16.mxu0 0
  %456 = vmatpush1.bf16.msra.mxu0 %v175
  %457 = vmatprep.subr.bf16.mxu0 0
  %458 = vmatpush1.bf16.msra.mxu0 %v170
  %459 = vmatprep.subr.bf16.mxu0 0
  %460 = vmatpush1.bf16.msra.mxu0 %v165
  %461 = vmatprep.subr.bf16.mxu0 0
  %462 = vmatpush1.bf16.msra.mxu0 %v160
  %463 = vmatprep.subr.bf16.mxu0 0
  %464 = vmatpush2.bf16.msra.mxu0 0
  %465 = vmatprep.subr.bf16.mxu0 0
  %466 = vmatpush2.bf16.msra.mxu0 0
  %467 = vmatprep.subr.bf16.mxu0 0
  %468 = vmatpush2.bf16.msra.mxu0 0
  %469 = vmatprep.subr.bf16.mxu0 0
  %470 = vmatpush2.bf16.msra.mxu0 0
  %471 = vmatprep.subr.bf16.mxu0 0
  %472 = vmatpush2.bf16.msra.mxu0 0
  %473 = vmatprep.subr.bf16.mxu0 0
  %474 = vmatpush2.bf16.msra.mxu0 0
  %475 = vmatprep.subr.bf16.mxu0 0
  %476 = vmatpush2.bf16.msra.mxu0 0
  %477 = vmatprep.subr.bf16.mxu0 0
  %478 = vmatpush2.bf16.msra.mxu0 0
  %479 = vmatprep.mubr.bf16.mxu0 0
  %480 = vmatmul.mubr.bf16.gmra.mxu0 %v198
  %v481 = vpop.f32.mrf.mxu0
  %v482 = vadd.f32 0.0, %v481
  %v483 = vpop.f32.mrf.mxu0
  %v484 = vpop.f32.mrf.mxu0
  %v485 = vadd.f32 0.0, %v484
  %v486 = vpop.f32.mrf.mxu0
  %487 = vmatprep.mubr.bf16.mxu0 0
  %488 = vmatmul.mubr.bf16.gmra.mxu0 %v201
  %v489 = vpop.f32.mrf.mxu0
  %v490 = vadd.f32 0.0, %v489
  %v491 = vpop.f32.mrf.mxu0
  %v492 = vpop.f32.mrf.mxu0
  %v493 = vadd.f32 0.0, %v492
  %v494 = vpop.f32.mrf.mxu0
  %495 = vmatprep.mubr.bf16.mxu0 0
  %496 = vmatmul.mubr.bf16.gmra.mxu0 %v204
  %v497 = vpop.f32.mrf.mxu0
  %v498 = vadd.f32 0.0, %v497
  %v499 = vpop.f32.mrf.mxu0
  %v500 = vpop.f32.mrf.mxu0
  %v501 = vadd.f32 0.0, %v500
  %v502 = vpop.f32.mrf.mxu0
  %503 = vmatprep.mubr.bf16.mxu0 0
  %504 = vmatmul.mubr.bf16.gmra.mxu0 %v207
  %v505 = vpop.f32.mrf.mxu0
  %v506 = vadd.f32 0.0, %v505
  %v507 = vpop.f32.mrf.mxu0
  %v508 = vpop.f32.mrf.mxu0
  %v509 = vadd.f32 0.0, %v508
  %v510 = vpop.f32.mrf.mxu0
  %511 = vmatprep.mubr.bf16.mxu0 0
  %512 = vmatmul.mubr.bf16.gmra.mxu0 %v210
  %v513 = vpop.f32.mrf.mxu0
  %v514 = vadd.f32 0.0, %v513
  %v515 = vpop.f32.mrf.mxu0
  %v516 = vpop.f32.mrf.mxu0
  %v517 = vadd.f32 0.0, %v516
  %v518 = vpop.f32.mrf.mxu0
  %519 = vmatprep.mubr.bf16.mxu0 0
  %520 = vmatmul.mubr.bf16.gmra.mxu0 %v213
  %v521 = vpop.f32.mrf.mxu0
  %v522 = vadd.f32 0.0, %v521
  %v523 = vpop.f32.mrf.mxu0
  %v524 = vpop.f32.mrf.mxu0
  %v525 = vadd.f32 0.0, %v524
  %v526 = vpop.f32.mrf.mxu0
  %527 = vmatprep.mubr.bf16.mxu0 0
  %528 = vmatmul.mubr.bf16.gmra.mxu0 %v216
  %v529 = vpop.f32.mrf.mxu0
  %v530 = vadd.f32 0.0, %v529
  %v531 = vpop.f32.mrf.mxu0
  %v532 = vpop.f32.mrf.mxu0
  %v533 = vadd.f32 0.0, %v532
  %v534 = vpop.f32.mrf.mxu0
  %535 = vmatprep.mubr.bf16.mxu0 0
  %536 = vmatmul.mubr.bf16.gmra.mxu0 %v219
  %v537 = vpop.f32.mrf.mxu0
  %v538 = vadd.f32 0.0, %v537
  %v539 = vpop.f32.mrf.mxu0
  %v540 = vpop.f32.mrf.mxu0
  %v541 = vadd.f32 0.0, %v540
  %v542 = vpop.f32.mrf.mxu0
  %543 = vdwg.mxu0
  %544 = vst [vmem:[%s2] sm:$0xff] %v256
  %545 = vst [vmem:[%s2 + $0x8] sm:$0xff] %v258
  %546 = vst [vmem:[%s2 + $0x10] sm:$0xff] %v369
  %547 = vst [vmem:[%s2 + $0x18] sm:$0xff] %v371
  %548 = vst [vmem:[%s2 + $0x20] sm:$0xff] %v482
  %549 = vst [vmem:[%s2 + $0x28] sm:$0xff] %v260
  %550 = vst [vmem:[%s2 + $0x30] sm:$0xff] %v262
  %551 = vst [vmem:[%s2 + $0x38] sm:$0xff] %v373
  %552 = vst [vmem:[%s2 + $0x40] sm:$0xff] %v375
  %553 = vst [vmem:[%s2 + $0x48] sm:$0xff] %v485
  %554 = vst [vmem:[%s2 + $0x50] sm:$0xff] %v266
  %555 = vst [vmem:[%s2 + $0x58] sm:$0xff] %v268
  %556 = vst [vmem:[%s2 + $0x60] sm:$0xff] %v379
  %557 = vst [vmem:[%s2 + $0x68] sm:$0xff] %v381
  %558 = vst [vmem:[%s2 + $0x70] sm:$0xff] %v490
  %559 = vst [vmem:[%s2 + $0x78] sm:$0xff] %v270
  %560 = vst [vmem:[%s2 + $0x80] sm:$0xff] %v272
  %561 = vst [vmem:[%s2 + $0x88] sm:$0xff] %v383
  %562 = vst [vmem:[%s2 + $0x90] sm:$0xff] %v385
  %563 = vst [vmem:[%s2 + $0x98] sm:$0xff] %v493
  %564 = vst [vmem:[%s2 + $0xa0] sm:$0xff] %v276
  %565 = vst [vmem:[%s2 + $0xa8] sm:$0xff] %v278
  %566 = vst [vmem:[%s2 + $0xb0] sm:$0xff] %v389
  %567 = vst [vmem:[%s2 + $0xb8] sm:$0xff] %v391
  %568 = vst [vmem:[%s2 + $0xc0] sm:$0xff] %v498
  %569 = vst [vmem:[%s2 + $0xc8] sm:$0xff] %v280
  %570 = vst [vmem:[%s2 + $0xd0] sm:$0xff] %v282
  %571 = vst [vmem:[%s2 + $0xd8] sm:$0xff] %v393
  %572 = vst [vmem:[%s2 + $0xe0] sm:$0xff] %v395
  %573 = vst [vmem:[%s2 + $0xe8] sm:$0xff] %v501
  %574 = vst [vmem:[%s2 + $0xf0] sm:$0xff] %v286
  %575 = vst [vmem:[%s2 + $0xf8] sm:$0xff] %v288
  %576 = vst [vmem:[%s2 + $0x100] sm:$0xff] %v399
  %577 = vst [vmem:[%s2 + $0x108] sm:$0xff] %v401
  %578 = vst [vmem:[%s2 + $0x110] sm:$0xff] %v506
  %579 = vst [vmem:[%s2 + $0x118] sm:$0xff] %v290
  %580 = vst [vmem:[%s2 + $0x120] sm:$0xff] %v292
  %581 = vst [vmem:[%s2 + $0x128] sm:$0xff] %v403
  %582 = vst [vmem:[%s2 + $0x130] sm:$0xff] %v405
  %583 = vst [vmem:[%s2 + $0x138] sm:$0xff] %v509
  %584 = vst [vmem:[%s2 + $0x140] sm:$0xff] %v296
  %585 = vst [vmem:[%s2 + $0x148] sm:$0xff] %v298
  %586 = vst [vmem:[%s2 + $0x150] sm:$0xff] %v409
  %587 = vst [vmem:[%s2 + $0x158] sm:$0xff] %v411
  %588 = vst [vmem:[%s2 + $0x160] sm:$0xff] %v514
  %589 = vst [vmem:[%s2 + $0x168] sm:$0xff] %v300
  %590 = vst [vmem:[%s2 + $0x170] sm:$0xff] %v302
  %591 = vst [vmem:[%s2 + $0x178] sm:$0xff] %v413
  %592 = vst [vmem:[%s2 + $0x180] sm:$0xff] %v415
  %593 = vst [vmem:[%s2 + $0x188] sm:$0xff] %v517
  %594 = vst [vmem:[%s2 + $0x190] sm:$0xff] %v306
  %595 = vst [vmem:[%s2 + $0x198] sm:$0xff] %v308
  %596 = vst [vmem:[%s2 + $0x1a0] sm:$0xff] %v419
  %597 = vst [vmem:[%s2 + $0x1a8] sm:$0xff] %v421
  %598 = vst [vmem:[%s2 + $0x1b0] sm:$0xff] %v522
  %599 = vst [vmem:[%s2 + $0x1b8] sm:$0xff] %v310
  %600 = vst [vmem:[%s2 + $0x1c0] sm:$0xff] %v312
  %601 = vst [vmem:[%s2 + $0x1c8] sm:$0xff] %v423
  %602 = vst [vmem:[%s2 + $0x1d0] sm:$0xff] %v425
  %603 = vst [vmem:[%s2 + $0x1d8] sm:$0xff] %v525
  %604 = vst [vmem:[%s2 + $0x1e0] sm:$0xff] %v316
  %605 = vst [vmem:[%s2 + $0x1e8] sm:$0xff] %v318
  %606 = vst [vmem:[%s2 + $0x1f0] sm:$0xff] %v429
  %607 = vst [vmem:[%s2 + $0x1f8] sm:$0xff] %v431
  %608 = vst [vmem:[%s2 + $0x200] sm:$0xff] %v530
  %609 = vst [vmem:[%s2 + $0x208] sm:$0xff] %v320
  %610 = vst [vmem:[%s2 + $0x210] sm:$0xff] %v322
  %611 = vst [vmem:[%s2 + $0x218] sm:$0xff] %v433
  %612 = vst [vmem:[%s2 + $0x220] sm:$0xff] %v435
  %613 = vst [vmem:[%s2 + $0x228] sm:$0xff] %v533
  %614 = vst [vmem:[%s2 + $0x230] sm:$0xff] %v326
  %615 = vst [vmem:[%s2 + $0x238] sm:$0xff] %v328
  %616 = vst [vmem:[%s2 + $0x240] sm:$0xff] %v439
  %617 = vst [vmem:[%s2 + $0x248] sm:$0xff] %v441
  %618 = vst [vmem:[%s2 + $0x250] sm:$0xff] %v538
  %619 = vst [vmem:[%s2 + $0x258] sm:$0xff] %v330
  %620 = vst [vmem:[%s2 + $0x260] sm:$0xff] %v332
  %621 = vst [vmem:[%s2 + $0x268] sm:$0xff] %v443
  %622 = vst [vmem:[%s2 + $0x270] sm:$0xff] %v445
  %623 = vst [vmem:[%s2 + $0x278] sm:$0xff] %v541
  // Predicated region
  $region10: #{mlstm_forward.2} parent=0 // pred_check
    _
  $region11: #{mlstm_forward.2} parent=0 // pred_check_branch
    %625 = sbr.rel (0) target = $region13
  $region12: #{mlstm_forward.2} parent=0 // pred_region
    _
  $region13: #{mlstm_forward.2} parent=0 // pred_fallthru
    _
  // Predicated region
  $region14: #{mlstm_forward.2} parent=0 // pred_check
    _
  $region15: #{mlstm_forward.2} parent=0 // pred_check_branch
    %627 = sbr.rel (0) target = $region17
  $region16: #{mlstm_forward.2} parent=0 // pred_region
    _
  $region17: #{mlstm_forward.2} parent=0 // pred_fallthru
    _

// kernel: mlstm_forward.3
$region0: #{mlstm_forward.3}
  #allocation0 [shape = 'u32[]', space=smem, size = 0x4, offset = 0x4, fixed_abs, tag = 'smem constant byte address 0x4 - core index']
  #allocation1 [shape = 'u32[144,128]{1,0:T(1,128)}', space=vmem, size = 0x12000, scoped, tag = 'internal scratch']
  #allocation2 [shape = 'f32[8,128]{1,0:T(8,128)}', space=vmem, size = 0x1000, scoped, tag = 'scratch operand']
  #allocation3 [shape = 'f32[8,128]{1,0:T(8,128)}', space=vmem, size = 0x1000, scoped, tag = 'scratch operand']
  %s0 = inlined_call_operand.vmem [shape: f32[16,8,640], index: 0, kind: input, shape index: {}]
  %s1 = inlined_call_operand.vmem [shape: f32[8,128], index: 1, kind: input, shape index: {}]
  %s2 = inlined_call_operand.vmem [shape: f32[8,128], index: 2, kind: input, shape index: {}]
  %s3 = inlined_call_operand.vmem [shape: bf16[128,128], index: 3, kind: input, shape index: {}]
  %s4 = inlined_call_operand.vmem [shape: bf16[128,512], index: 4, kind: input, shape index: {}]
  %s5 = inlined_call_operand.vmem [shape: f32[1,512], index: 5, kind: input, shape index: {}]
  %s6 = inlined_call_operand.hbm [shape: f32[16,8,128], index: 6, kind: output, shape index: {0}]
  %s7 = inlined_call_operand.hbm [shape: f32[16,8,128], index: 7, kind: output, shape index: {1}]
  %8 = xla_tuple %s6, %s7
  %s9 = sld [smem:[#allocation0]]
  $region69: #{mlstm_forward.3} parent=0
    _
  %s11 = ssub.s32 1, %s9
  %s12 = scalar_select 0, %s11, %s9
  $region1: #{mlstm_forward.3} parent=0
    #allocation4 [shape = 'u8[8192]{0}', space=vmem, size = 0x2000, scoped, tag = 'output window, operand 0']
    #allocation5 [shape = 's32[2]{0}', space=sflag, size = 0x8, scoped, tag = 'scoped memory for mlstm_forward.3']
    #allocation6 [shape = 'u8[8192]{0}', space=vmem, size = 0x2000, scoped, tag = 'output window, operand 1']
    #allocation7 [shape = 's32[2]{0}', space=sflag, size = 0x8, scoped, tag = 'scoped memory for mlstm_forward.3']
    %13 = vsyncpa [#allocation5], 0
    %s14 = scalar_lea.sflag [#allocation5], 1
    %15 = vsyncpa %s14, 0
    %16 = vsyncpa [#allocation7], 0
    %s17 = scalar_lea.sflag [#allocation7], 1
    %18 = vsyncpa %s17, 0
    loop: start=0, step=1, limit=18
    $region2: #{mlstm_forward.3} parent=1 // loop_pre_header
      _
    $region3: #{mlstm_forward.3} parent=1 // loop_header
      %s20 = sphi 0, %s24
      %p21 = scmp.ge.s32.totalorder %s20, 18
      %s27 = sphi 0, %s39
      %s28 = sphi 0, %s35
      %s29 = sphi 0, %s27
      %s30 = sphi 0, %s28
      %s31 = sphi 0, %s29
      %s32 = sphi 0, %s30
      %s44 = sphi 0, %s46
      %s47 = sphi 0, %s44
      %s48 = sphi 0, %s47
      %s64 = sphi 0, %s48
      %s70 = sphi 0, %s72
      %s73 = sphi 0, %s70
      %s74 = sphi 0, %s73
      %s90 = sphi 0, %s74
      %s96 = sphi 0, %s98
      %s99 = sphi 0, %s96
      %s100 = sphi 0, %s99
      %s116 = sphi 0, %s100
      %s120 = sphi 0, %s120
      %s122 = sphi 0, %s120
      %s123 = sphi 0, %s122
      %s137 = sphi 0, %s123
      %s141 = sphi 0, %s141
      %s143 = sphi 0, %s141
      %s144 = sphi 0, %s143
      %s158 = sphi 0, %s144
      %s162 = sphi 0, %s162
      %s164 = sphi 0, %s162
      %s165 = sphi 0, %s164
      %s179 = sphi 0, %s165
      %s187 = sphi 0, %s189
      %s190 = sphi 0, %s187
      %s191 = sphi 0, %s190
      %s207 = sphi 0, %s191
      %s215 = sphi 0, %s217
      %s218 = sphi 0, %s215
      %s219 = sphi 0, %s218
      %s235 = sphi 0, %s219
    $region4: #{mlstm_forward.3} parent=1 // loop_header_branch
      %23 = sbr.rel (%p21) target = $region8
    $region5: #{mlstm_forward.3} parent=1 // loop_body
      %s25 = ssub.s32 %s20, 1
      %s26 = ssub.s32 %s20, 2
      %s33 = sadd.s32 1, %s28
      %p34 = scmp.ge.s32.totalorder %s33, 16
      %s35 = scalar_select %p34, 0, %s33
      %s36 = sadd.s32 1, %s27
      %s37 = scalar_select %p34, %s36, %s27
      %p38 = scmp.ge.s32.totalorder %s37, 1
      %s39 = scalar_select %p38, 0, %s37
      %s40 = ssub.s32 %s28, %s35
      %s41 = ssub.s32 %s27, %s39
      %s42 = sor.u32 %s40, %s41
      %p43 = scmp.eq.s32.totalorder %s42, 0
      %s45 = sadd.s32 %s44, 1
      %s46 = scalar_select %p43, %s44, %s45
      %p49 = pneg %p43
      %p50 = scmp.eq.s32.totalorder %s20, 15
      %p51 = por %p49, %p50
      %p52 = scmp.ne.s32.totalorder %s44, %s47
      %p53 = scmp.eq.s32.totalorder %s20, 0
      %p54 = por %p52, %p53
      %p55 = scmp.ne.s32.totalorder %s44, %s47
      %p56 = scmp.eq.s32.totalorder %s25, 15
      %p57 = por %p55, %p56
      %p58 = scmp.ne.s32.totalorder %s47, %s48
      %p59 = scmp.eq.s32.totalorder %s25, 0
      %p60 = por %p58, %p59
      %p61 = scmp.ne.s32.totalorder %s47, %s48
      %p62 = scmp.eq.s32.totalorder %s26, 15
      %p63 = por %p61, %p62
      %p65 = scmp.ne.s32.totalorder %s48, %s64
      %p66 = scmp.eq.s32.totalorder %s26, 0
      %p67 = por %p65, %p66
      %s68 = ssub.s32 %s27, %s39
      %p69 = scmp.eq.s32.totalorder %s68, 0
      %s71 = sadd.s32 %s70, 1
      %s72 = scalar_select %p69, %s70, %s71
      %p75 = pneg %p69
      %p76 = scmp.eq.s32.totalorder %s20, 15
      %p77 = por %p75, %p76
      %p78 = scmp.ne.s32.totalorder %s70, %s73
      %p79 = scmp.eq.s32.totalorder %s20, 0
      %p80 = por %p78, %p79
      %p81 = scmp.ne.s32.totalorder %s70, %s73
      %p82 = scmp.eq.s32.totalorder %s25, 15
      %p83 = por %p81, %p82
      %p84 = scmp.ne.s32.totalorder %s73, %s74
      %p85 = scmp.eq.s32.totalorder %s25, 0
      %p86 = por %p84, %p85
      %p87 = scmp.ne.s32.totalorder %s73, %s74
      %p88 = scmp.eq.s32.totalorder %s26, 15
      %p89 = por %p87, %p88
      %p91 = scmp.ne.s32.totalorder %s74, %s90
      %p92 = scmp.eq.s32.totalorder %s26, 0
      %p93 = por %p91, %p92
      %s94 = ssub.s32 %s27, %s39
      %p95 = scmp.eq.s32.totalorder %s94, 0
      %s97 = sadd.s32 %s96, 1
      %s98 = scalar_select %p95, %s96, %s97
      %p101 = pneg %p95
      %p102 = scmp.eq.s32.totalorder %s20, 15
      %p103 = por %p101, %p102
      %p104 = scmp.ne.s32.totalorder %s96, %s99
      %p105 = scmp.eq.s32.totalorder %s20, 0
      %p106 = por %p104, %p105
      %p107 = scmp.ne.s32.totalorder %s96, %s99
      %p108 = scmp.eq.s32.totalorder %s25, 15
      %p109 = por %p107, %p108
      %p110 = scmp.ne.s32.totalorder %s99, %s100
      %p111 = scmp.eq.s32.totalorder %s25, 0
      %p112 = por %p110, %p111
      %p113 = scmp.ne.s32.totalorder %s99, %s100
      %p114 = scmp.eq.s32.totalorder %s26, 15
      %p115 = por %p113, %p114
      %p117 = scmp.ne.s32.totalorder %s100, %s116
      %p118 = scmp.eq.s32.totalorder %s26, 0
      %p119 = por %p117, %p118
      %s121 = sadd.s32 %s120, 1
      %p124 = scmp.eq.s32.totalorder %s20, 15
      %p125 = scmp.ne.s32.totalorder %s120, %s122
      %p126 = scmp.eq.s32.totalorder %s20, 0
      %p127 = por %p125, %p126
      %p128 = scmp.ne.s32.totalorder %s120, %s122
      %p129 = scmp.eq.s32.totalorder %s25, 15
      %p130 = por %p128, %p129
      %p131 = scmp.ne.s32.totalorder %s122, %s123
      %p132 = scmp.eq.s32.totalorder %s25, 0
      %p133 = por %p131, %p132
      %p134 = scmp.ne.s32.totalorder %s122, %s123
      %p135 = scmp.eq.s32.totalorder %s26, 15
      %p136 = por %p134, %p135
      %p138 = scmp.ne.s32.totalorder %s123, %s137
      %p139 = scmp.eq.s32.totalorder %s26, 0
      %p140 = por %p138, %p139
      %s142 = sadd.s32 %s141, 1
      %p145 = scmp.eq.s32.totalorder %s20, 15
      %p146 = scmp.ne.s32.totalorder %s141, %s143
      %p147 = scmp.eq.s32.totalorder %s20, 0
      %p148 = por %p146, %p147
      %p149 = scmp.ne.s32.totalorder %s141, %s143
      %p150 = scmp.eq.s32.totalorder %s25, 15
      %p151 = por %p149, %p150
      %p152 = scmp.ne.s32.totalorder %s143, %s144
      %p153 = scmp.eq.s32.totalorder %s25, 0
      %p154 = por %p152, %p153
      %p155 = scmp.ne.s32.totalorder %s143, %s144
      %p156 = scmp.eq.s32.totalorder %s26, 15
      %p157 = por %p155, %p156
      %p159 = scmp.ne.s32.totalorder %s144, %s158
      %p160 = scmp.eq.s32.totalorder %s26, 0
      %p161 = por %p159, %p160
      %s163 = sadd.s32 %s162, 1
      %p166 = scmp.eq.s32.totalorder %s20, 15
      %p167 = scmp.ne.s32.totalorder %s162, %s164
      %p168 = scmp.eq.s32.totalorder %s20, 0
      %p169 = por %p167, %p168
      %p170 = scmp.ne.s32.totalorder %s162, %s164
      %p171 = scmp.eq.s32.totalorder %s25, 15
      %p172 = por %p170, %p171
      %p173 = scmp.ne.s32.totalorder %s164, %s165
      %p174 = scmp.eq.s32.totalorder %s25, 0
      %p175 = por %p173, %p174
      %p176 = scmp.ne.s32.totalorder %s164, %s165
      %p177 = scmp.eq.s32.totalorder %s26, 15
      %p178 = por %p176, %p177
      %p180 = scmp.ne.s32.totalorder %s165, %s179
      %p181 = scmp.eq.s32.totalorder %s26, 0
      %p182 = por %p180, %p181
      %s183 = ssub.s32 %s28, %s35
      %s184 = ssub.s32 %s27, %s39
      %s185 = sor.u32 %s183, %s184
      %p186 = scmp.eq.s32.totalorder %s185, 0
      %s188 = sadd.s32 %s187, 1
      %s189 = scalar_select %p186, %s187, %s188
      %p192 = pneg %p186
      %p193 = scmp.eq.s32.totalorder %s20, 15
      %p194 = por %p192, %p193
      %p195 = scmp.ne.s32.totalorder %s187, %s190
      %p196 = scmp.eq.s32.totalorder %s20, 0
      %p197 = por %p195, %p196
      %p198 = scmp.ne.s32.totalorder %s187, %s190
      %p199 = scmp.eq.s32.totalorder %s25, 15
      %p200 = por %p198, %p199
      %p201 = scmp.ne.s32.totalorder %s190, %s191
      %p202 = scmp.eq.s32.totalorder %s25, 0
      %p203 = por %p201, %p202
      %p204 = scmp.ne.s32.totalorder %s190, %s191
      %p205 = scmp.eq.s32.totalorder %s26, 15
      %p206 = por %p204, %p205
      %p208 = scmp.ne.s32.totalorder %s191, %s207
      %p209 = scmp.eq.s32.totalorder %s26, 0
      %p210 = por %p208, %p209
      %s211 = ssub.s32 %s28, %s35
      %s212 = ssub.s32 %s27, %s39
      %s213 = sor.u32 %s211, %s212
      %p214 = scmp.eq.s32.totalorder %s213, 0
      %s216 = sadd.s32 %s215, 1
      %s217 = scalar_select %p214, %s215, %s216
      %p220 = pneg %p214
      %p221 = scmp.eq.s32.totalorder %s20, 15
      %p222 = por %p220, %p221
      %p223 = scmp.ne.s32.totalorder %s215, %s218
      %p224 = scmp.eq.s32.totalorder %s20, 0
      %p225 = por %p223, %p224
      %p226 = scmp.ne.s32.totalorder %s215, %s218
      %p227 = scmp.eq.s32.totalorder %s25, 15
      %p228 = por %p226, %p227
      %p229 = scmp.ne.s32.totalorder %s218, %s219
      %p230 = scmp.eq.s32.totalorder %s25, 0
      %p231 = por %p229, %p230
      %p232 = scmp.ne.s32.totalorder %s218, %s219
      %p233 = scmp.eq.s32.totalorder %s26, 15
      %p234 = por %p232, %p233
      %p236 = scmp.ne.s32.totalorder %s219, %s235
      %p237 = scmp.eq.s32.totalorder %s26, 0
      %p238 = por %p236, %p237
      %p239 = scmp.le.s32.totalorder 1, %s20
      %p240 = scmp.lt.s32.totalorder %s20, 17
      %p241 = pnand %p239, %p240
      %p242 = pneg %p241
      // Predicated region
      $region9: #{mlstm_forward.3} parent=5 // pred_check
        _
      $region10: #{mlstm_forward.3} parent=5 // pred_check_branch
        %244 = sbr.rel (%p241) target = $region12
      $region11: #{mlstm_forward.3} parent=5 // pred_region
        %s245 = ssub.s32 %s20, 1
        // Predicated region
        $region13: #{mlstm_forward.3} parent=11 // pred_check
          %p246 = pneg %p86
        $region14: #{mlstm_forward.3} parent=11 // pred_check_branch
          %248 = sbr.rel (%p246) target = $region16
        $region15: #{mlstm_forward.3} parent=11 // pred_region
          %p249 = scmp.lt.s32.totalorder %s29, 0
          %s250 = scalar_select %p249, %s29, 0
          %s251 = smul.addr %s250, 8
          %s252 = scalar_lea.vmem %s1, %s251
        $region16: #{mlstm_forward.3} parent=11 // pred_fallthru
          _
        // Predicated region
        $region17: #{mlstm_forward.3} parent=11 // pred_check
          %p253 = pneg %p112
        $region18: #{mlstm_forward.3} parent=11 // pred_check_branch
          %255 = sbr.rel (%p253) target = $region20
        $region19: #{mlstm_forward.3} parent=11 // pred_region
          %p256 = scmp.lt.s32.totalorder %s29, 0
          %s257 = scalar_select %p256, %s29, 0
          %s258 = smul.addr %s257, 8
          %s259 = scalar_lea.vmem %s2, %s258
        $region20: #{mlstm_forward.3} parent=11 // pred_fallthru
          _
        // Predicated region
        $region21: #{mlstm_forward.3} parent=11 // pred_check
          %p260 = pneg %p133
        $region22: #{mlstm_forward.3} parent=11 // pred_check_branch
          %262 = sbr.rel (%p260) target = $region24
        $region23: #{mlstm_forward.3} parent=11 // pred_region
          _
        $region24: #{mlstm_forward.3} parent=11 // pred_fallthru
          _
        // Predicated region
        $region25: #{mlstm_forward.3} parent=11 // pred_check
          %p263 = pneg %p154
        $region26: #{mlstm_forward.3} parent=11 // pred_check_branch
          %265 = sbr.rel (%p263) target = $region28
        $region27: #{mlstm_forward.3} parent=11 // pred_region
          _
        $region28: #{mlstm_forward.3} parent=11 // pred_fallthru
          _
        // Predicated region
        $region29: #{mlstm_forward.3} parent=11 // pred_check
          %p266 = pneg %p175
        $region30: #{mlstm_forward.3} parent=11 // pred_check_branch
          %268 = sbr.rel (%p266) target = $region32
        $region31: #{mlstm_forward.3} parent=11 // pred_region
          _
        $region32: #{mlstm_forward.3} parent=11 // pred_fallthru
          _
      $region12: #{mlstm_forward.3} parent=5 // pred_fallthru
        _
      %p269 = scmp.lt.s32.totalorder %s20, 16
      // Predicated region
      $region33: #{mlstm_forward.3} parent=5 // pred_check
        %p270 = pneg %p269
      $region34: #{mlstm_forward.3} parent=5 // pred_check_branch
        %272 = sbr.rel (%p270) target = $region36
      $region35: #{mlstm_forward.3} parent=5 // pred_region
        // Predicated region
        $region37: #{mlstm_forward.3} parent=35 // pred_check
          %p273 = pneg %p54
        $region38: #{mlstm_forward.3} parent=35 // pred_check_branch
          %275 = sbr.rel (%p273) target = $region40
        $region39: #{mlstm_forward.3} parent=35 // pred_region
          %p276 = scmp.lt.s32.totalorder %s28, 15
          %s277 = scalar_select %p276, %s28, 15
          %p278 = scmp.lt.s32.totalorder %s27, 0
          %s279 = scalar_select %p278, %s27, 0
          %s280 = smul.addr %s279, 5
          %s281 = smul.addr %s277, 5
          %s282 = sadd.s32 %s280, %s281
          %s283 = smul.addr %s282, 8
          %s284 = scalar_lea.vmem %s0, %s283
        $region40: #{mlstm_forward.3} parent=35 // pred_fallthru
          _
      $region36: #{mlstm_forward.3} parent=5 // pred_fallthru
        _
      %p285 = scmp.le.s32.totalorder 1, %s20
      %p286 = scmp.lt.s32.totalorder %s20, 17
      %p287 = pnand %p285, %p286
      %p288 = pneg %p287
      // Predicated region
      $region41: #{mlstm_forward.3} parent=5 // pred_check
        _
      $region42: #{mlstm_forward.3} parent=5 // pred_check_branch
        %290 = sbr.rel (%p287) target = $region44
      $region43: #{mlstm_forward.3} parent=5 // pred_region
        %s291 = ssub.s32 %s20, 1
        %p292 = scmp.lt.s32.totalorder %s30, 15
        %s293 = scalar_select %p292, %s30, 15
        %p294 = scmp.lt.s32.totalorder %s29, 0
        %s295 = scalar_select %p294, %s29, 0
        %s296 = smul.addr %s295, 5
        %s297 = smul.addr %s293, 5
        %s298 = sadd.s32 %s296, %s297
        %s299 = smul.addr %s298, 8
        %s300 = scalar_lea.vmem %s0, %s299
        %p301 = pneg %p60
        %p302 = pneg %p57
        %p303 = scmp.lt.s32.totalorder %s29, 0
        %s304 = scalar_select %p303, %s29, 0
        %s305 = smul.addr %s304, 8
        %s306 = scalar_lea.vmem %s1, %s305
        %p307 = pneg %p86
        %p308 = pneg %p83
        %p309 = scmp.lt.s32.totalorder %s29, 0
        %s310 = scalar_select %p309, %s29, 0
        %s311 = smul.addr %s310, 8
        %s312 = scalar_lea.vmem %s2, %s311
        %p313 = pneg %p112
        %p314 = pneg %p109
        %p315 = pneg %p133
        %p316 = pneg %p130
        %p317 = pneg %p154
        %p318 = pneg %p151
        %p319 = pneg %p175
        %p320 = pneg %p172
        %p321 = pneg %p203
        %p322 = pneg %p200
        %s323 = sand.u32 %s190, 1
        %s324 = scalar_lea.sflag [#allocation5], %s323
        %s325 = sand.u32 %s190, 1
        %s326 = smul.addr %s325, 8
        %s327 = scalar_lea.vmem [#allocation4], %s326
        %p328 = pneg %p231
        %p329 = pneg %p228
        %s330 = sand.u32 %s218, 1
        %s331 = scalar_lea.sflag [#allocation7], %s330
        %s332 = sand.u32 %s218, 1
        %s333 = smul.addr %s332, 8
        %s334 = scalar_lea.vmem [#allocation6], %s333
        %p335 = scmp.lt.s32.totalorder %s30, 15
        %s336 = scalar_select %p335, %s30, 15
        %p337 = scmp.lt.s32.totalorder %s29, 0
        %s338 = scalar_select %p337, %s29, 0
        %s339 = smul.addr %s338, 5
        %s340 = smul.addr %s336, 5
        %s341 = sadd.s32 %s339, %s340
        %s342 = smul.addr %s341, 8
        %s343 = scalar_lea.vmem %s0, %s342
        %p344 = scmp.lt.s32.totalorder %s29, 0
        %s345 = scalar_select %p344, %s29, 0
        %s346 = smul.addr %s345, 8
        %s347 = scalar_lea.vmem %s1, %s346
        %p348 = scmp.lt.s32.totalorder %s29, 0
        %s349 = scalar_select %p348, %s29, 0
        %s350 = smul.addr %s349, 8
        %s351 = scalar_lea.vmem %s2, %s350
        %p353 = scmp.eq.s32.totalorder %s30, 0
        // Predicated region
        $region45: #{mlstm_forward.3} parent=43 // pred_check
          %p354 = pneg %p353
        $region46: #{mlstm_forward.3} parent=43 // pred_check_branch
          %356 = sbr.rel (%p354) target = $region48
        $region47: #{mlstm_forward.3} parent=43 // pred_region
          %v357 = vld [vmem:[%s347] sm:$0xff]
          %358 = vst [vmem:[#allocation2] sm:$0xff] %v357
          %v359 = vld [vmem:[%s351] sm:$0xff]
          %360 = vst [vmem:[#allocation3] sm:$0xff] %v359
        $region48: #{mlstm_forward.3} parent=43 // pred_fallthru
          _
        %v361 = vld [vmem:[%s343] sm:$0xff]
        %v362 = vld [vmem:[%s343 + $0x8] sm:$0xff]
        %v363 = vld [vmem:[%s343 + $0x10] sm:$0xff]
        %v364 = vld [vmem:[%s343 + $0x18] sm:$0xff]
        %v365 = vld [vmem:[%s343 + $0x20] sm:$0xff]
        %v366 = vld [vmem:[#allocation2] sm:$0xff]
        %v367 = vld [vmem:[#allocation3] sm:$0xff]
        %v368 = vpack.c.bf16 %v366, %v366
        %v369 = vld [vmem:[%s3] sm:$0xf]
        %v370 = vld [vmem:[%s3 + $0x4] sm:$0xf]
        %v371 = vld [vmem:[%s3 + $0x8] sm:$0xf]
        %v372 = vld [vmem:[%s3 + $0xc] sm:$0xf]
        %v373 = vld [vmem:[%s3 + $0x10] sm:$0xf]
        %v374 = vld [vmem:[%s3 + $0x14] sm:$0xf]
        %v375 = vld [vmem:[%s3 + $0x18] sm:$0xf]
        %v376 = vld [vmem:[%s3 + $0x1c] sm:$0xf]
        %v377 = vld [vmem:[%s3 + $0x20] sm:$0xf]
        %v378 = vld [vmem:[%s3 + $0x24] sm:$0xf]
        %v379 = vld [vmem:[%s3 + $0x28] sm:$0xf]
        %v380 = vld [vmem:[%s3 + $0x2c] sm:$0xf]
        %v381 = vld [vmem:[%s3 + $0x30] sm:$0xf]
        %v382 = vld [vmem:[%s3 + $0x34] sm:$0xf]
        %v383 = vld [vmem:[%s3 + $0x38] sm:$0xf]
        %v384 = vld [vmem:[%s3 + $0x3c] sm:$0xf]
        %v401 = vunpack.c.l.b16 %v369
        %v402 = vunpack.c.l.b16 %v370
        %v403 = vunpack.c.l.b16 %v371
        %v404 = vunpack.c.l.b16 %v372
        %v405 = vunpack.c.l.b16 %v373
        %v406 = vunpack.c.l.b16 %v374
        %v407 = vunpack.c.l.b16 %v375
        %v408 = vunpack.c.l.b16 %v376
        %v409 = vunpack.c.l.b16 %v377
        %v410 = vunpack.c.l.b16 %v378
        %v411 = vunpack.c.l.b16 %v379
        %v412 = vunpack.c.l.b16 %v380
        %v413 = vunpack.c.l.b16 %v381
        %v414 = vunpack.c.l.b16 %v382
        %v415 = vunpack.c.l.b16 %v383
        %v416 = vunpack.c.l.b16 %v384
        %v417 = vpack.c.b16 %v402, %v401
        %v418 = vpack.c.b16 %v404, %v403
        %v419 = vpack.c.b16 %v406, %v405
        %v420 = vpack.c.b16 %v408, %v407
        %v421 = vpack.c.b16 %v410, %v409
        %v422 = vpack.c.b16 %v412, %v411
        %v423 = vpack.c.b16 %v414, %v413
        %v424 = vpack.c.b16 %v416, %v415
        %433 = vmatprep.subr.bf16.mxu0 0
        %434 = vmatpush1.bf16.msra.mxu0 %v424
        %435 = vmatprep.subr.bf16.mxu0 0
        %436 = vmatpush1.bf16.msra.mxu0 %v423
        %437 = vmatprep.subr.bf16.mxu0 0
        %438 = vmatpush1.bf16.msra.mxu0 %v422
        %439 = vmatprep.subr.bf16.mxu0 0
        %440 = vmatpush1.bf16.msra.mxu0 %v421
        %441 = vmatprep.subr.bf16.mxu0 0
        %442 = vmatpush1.bf16.msra.mxu0 %v420
        %443 = vmatprep.subr.bf16.mxu0 0
        %444 = vmatpush1.bf16.msra.mxu0 %v419
        %445 = vmatprep.subr.bf16.mxu0 0
        %446 = vmatpush1.bf16.msra.mxu0 %v418
        %447 = vmatprep.subr.bf16.mxu0 0
        %448 = vmatpush1.bf16.msra.mxu0 %v417
        %449 = vmatprep.subr.bf16.mxu0 0
        %450 = vmatpush2.bf16.msra.mxu0 0
        %451 = vmatprep.subr.bf16.mxu0 0
        %452 = vmatpush2.bf16.msra.mxu0 0
        %453 = vmatprep.subr.bf16.mxu0 0
        %454 = vmatpush2.bf16.msra.mxu0 0
        %455 = vmatprep.subr.bf16.mxu0 0
        %456 = vmatpush2.bf16.msra.mxu0 0
        %457 = vmatprep.subr.bf16.mxu0 0
        %458 = vmatpush2.bf16.msra.mxu0 0
        %459 = vmatprep.subr.bf16.mxu0 0
        %460 = vmatpush2.bf16.msra.mxu0 0
        %461 = vmatprep.subr.bf16.mxu0 0
        %462 = vmatpush2.bf16.msra.mxu0 0
        %463 = vmatprep.subr.bf16.mxu0 0
        %464 = vmatpush2.bf16.msra.mxu0 0
        %465 = vmatprep.mubr.bf16.mxu0 0
        %466 = vmatmul.mubr.bf16.gmra.mxu0 %v368
        %v467 = vpop.f32.mrf.mxu0
        %v468 = vadd.f32 0.0, %v467
        %v469 = vpop.f32.mrf.mxu0
        %v470 = vpop.f32.mrf.mxu0
        %v471 = vpop.f32.mrf.mxu0
        %472 = vdwg.mxu0
        %v473 = vmul.f32 %v361, %v468
        %v474 = vpack.c.bf16 %v473, %v473
        %v475 = vld [vmem:[%s4] sm:$0xff]
        %v476 = vld [vmem:[%s4 + $0x8] sm:$0xff]
        %v477 = vld [vmem:[%s4 + $0x10] sm:$0xff]
        %v478 = vld [vmem:[%s4 + $0x18] sm:$0xff]
        %v479 = vld [vmem:[%s4 + $0x20] sm:$0xff]
        %v480 = vld [vmem:[%s4 + $0x28] sm:$0xff]
        %v481 = vld [vmem:[%s4 + $0x30] sm:$0xff]
        %v482 = vld [vmem:[%s4 + $0x38] sm:$0xff]
        %v483 = vld [vmem:[%s4 + $0x40] sm:$0xff]
        %v484 = vld [vmem:[%s4 + $0x48] sm:$0xff]
        %v485 = vld [vmem:[%s4 + $0x50] sm:$0xff]
        %v486 = vld [vmem:[%s4 + $0x58] sm:$0xff]
        %v487 = vld [vmem:[%s4 + $0x60] sm:$0xff]
        %v488 = vld [vmem:[%s4 + $0x68] sm:$0xff]
        %v489 = vld [vmem:[%s4 + $0x70] sm:$0xff]
        %v490 = vld [vmem:[%s4 + $0x78] sm:$0xff]
        %v491 = vld [vmem:[%s4 + $0x80] sm:$0xff]
        %v492 = vld [vmem:[%s4 + $0x88] sm:$0xff]
        %v493 = vld [vmem:[%s4 + $0x90] sm:$0xff]
        %v494 = vld [vmem:[%s4 + $0x98] sm:$0xff]
        %v495 = vld [vmem:[%s4 + $0xa0] sm:$0xff]
        %v496 = vld [vmem:[%s4 + $0xa8] sm:$0xff]
        %v497 = vld [vmem:[%s4 + $0xb0] sm:$0xff]
        %v498 = vld [vmem:[%s4 + $0xb8] sm:$0xff]
        %v499 = vld [vmem:[%s4 + $0xc0] sm:$0xff]
        %v500 = vld [vmem:[%s4 + $0xc8] sm:$0xff]
        %v501 = vld [vmem:[%s4 + $0xd0] sm:$0xff]
        %v502 = vld [vmem:[%s4 + $0xd8] sm:$0xff]
        %v503 = vld [vmem:[%s4 + $0xe0] sm:$0xff]
        %v504 = vld [vmem:[%s4 + $0xe8] sm:$0xff]
        %v505 = vld [vmem:[%s4 + $0xf0] sm:$0xff]
        %v506 = vld [vmem:[%s4 + $0xf8] sm:$0xff]
        %v539 = vunpack.c.l.b16 %v475
        %v540 = vunpack.c.h.b16 %v475
        %v541 = vunpack.c.l.b16 %v476
        %v542 = vunpack.c.h.b16 %v476
        %v543 = vunpack.c.l.b16 %v477
        %v544 = vunpack.c.h.b16 %v477
        %v545 = vunpack.c.l.b16 %v478
        %v546 = vunpack.c.h.b16 %v478
        %v547 = vunpack.c.l.b16 %v479
        %v548 = vunpack.c.h.b16 %v479
        %v549 = vunpack.c.l.b16 %v480
        %v550 = vunpack.c.h.b16 %v480
        %v551 = vunpack.c.l.b16 %v481
        %v552 = vunpack.c.h.b16 %v481
        %v553 = vunpack.c.l.b16 %v482
        %v554 = vunpack.c.h.b16 %v482
        %v555 = vunpack.c.l.b16 %v483
        %v556 = vunpack.c.h.b16 %v483
        %v557 = vunpack.c.l.b16 %v484
        %v558 = vunpack.c.h.b16 %v484
        %v559 = vunpack.c.l.b16 %v485
        %v560 = vunpack.c.h.b16 %v485
        %v561 = vunpack.c.l.b16 %v486
        %v562 = vunpack.c.h.b16 %v486
        %v563 = vunpack.c.l.b16 %v487
        %v564 = vunpack.c.h.b16 %v487
        %v565 = vunpack.c.l.b16 %v488
        %v566 = vunpack.c.h.b16 %v488
        %v567 = vunpack.c.l.b16 %v489
        %v568 = vunpack.c.h.b16 %v489
        %v569 = vunpack.c.l.b16 %v490
        %v570 = vunpack.c.h.b16 %v490
        %v571 = vunpack.c.l.b16 %v491
        %v572 = vunpack.c.h.b16 %v491
        %v573 = vunpack.c.l.b16 %v492
        %v574 = vunpack.c.h.b16 %v492
        %v575 = vunpack.c.l.b16 %v493
        %v576 = vunpack.c.h.b16 %v493
        %v577 = vunpack.c.l.b16 %v494
        %v578 = vunpack.c.h.b16 %v494
        %v579 = vunpack.c.l.b16 %v495
        %v580 = vunpack.c.h.b16 %v495
        %v581 = vunpack.c.l.b16 %v496
        %v582 = vunpack.c.h.b16 %v496
        %v583 = vunpack.c.l.b16 %v497
        %v584 = vunpack.c.h.b16 %v497
        %v585 = vunpack.c.l.b16 %v498
        %v586 = vunpack.c.h.b16 %v498
        %v587 = vunpack.c.l.b16 %v499
        %v588 = vunpack.c.h.b16 %v499
        %v589 = vunpack.c.l.b16 %v500
        %v590 = vunpack.c.h.b16 %v500
        %v591 = vunpack.c.l.b16 %v501
        %v592 = vunpack.c.h.b16 %v501
        %v593 = vunpack.c.l.b16 %v502
        %v594 = vunpack.c.h.b16 %v502
        %v595 = vunpack.c.l.b16 %v503
        %v596 = vunpack.c.h.b16 %v503
        %v597 = vunpack.c.l.b16 %v504
        %v598 = vunpack.c.h.b16 %v504
        %v599 = vunpack.c.l.b16 %v505
        %v600 = vunpack.c.h.b16 %v505
        %v601 = vunpack.c.l.b16 %v506
        %v602 = vunpack.c.h.b16 %v506
        %v603 = vpack.c.b16 %v543, %v539
        %v604 = vpack.c.b16 %v544, %v540
        %v605 = vpack.c.b16 %v545, %v541
        %v606 = vpack.c.b16 %v546, %v542
        %v607 = vpack.c.b16 %v551, %v547
        %v608 = vpack.c.b16 %v552, %v548
        %v609 = vpack.c.b16 %v553, %v549
        %v610 = vpack.c.b16 %v554, %v550
        %v611 = vpack.c.b16 %v559, %v555
        %v612 = vpack.c.b16 %v560, %v556
        %v613 = vpack.c.b16 %v561, %v557
        %v614 = vpack.c.b16 %v562, %v558
        %v615 = vpack.c.b16 %v567, %v563
        %v616 = vpack.c.b16 %v568, %v564
        %v617 = vpack.c.b16 %v569, %v565
        %v618 = vpack.c.b16 %v570, %v566
        %v619 = vpack.c.b16 %v575, %v571
        %v620 = vpack.c.b16 %v576, %v572
        %v621 = vpack.c.b16 %v577, %v573
        %v622 = vpack.c.b16 %v578, %v574
        %v623 = vpack.c.b16 %v583, %v579
        %v624 = vpack.c.b16 %v584, %v580
        %v625 = vpack.c.b16 %v585, %v581
        %v626 = vpack.c.b16 %v586, %v582
        %v627 = vpack.c.b16 %v591, %v587
        %v628 = vpack.c.b16 %v592, %v588
        %v629 = vpack.c.b16 %v593, %v589
        %v630 = vpack.c.b16 %v594, %v590
        %v631 = vpack.c.b16 %v599, %v595
        %v632 = vpack.c.b16 %v600, %v596
        %v633 = vpack.c.b16 %v601, %v597
        %v634 = vpack.c.b16 %v602, %v598
        %667 = vmatprep.subr.bf16.mxu0 %v632
        %668 = vmatpush1.bf16.msra.mxu0 %v631
        %669 = vmatprep.subr.bf16.mxu0 %v628
        %670 = vmatpush1.bf16.msra.mxu0 %v627
        %671 = vmatprep.subr.bf16.mxu0 %v624
        %672 = vmatpush1.bf16.msra.mxu0 %v623
        %673 = vmatprep.subr.bf16.mxu0 %v620
        %674 = vmatpush1.bf16.msra.mxu0 %v619
        %675 = vmatprep.subr.bf16.mxu0 %v616
        %676 = vmatpush1.bf16.msra.mxu0 %v615
        %677 = vmatprep.subr.bf16.mxu0 %v612
        %678 = vmatpush1.bf16.msra.mxu0 %v611
        %679 = vmatprep.subr.bf16.mxu0 %v608
        %680 = vmatpush1.bf16.msra.mxu0 %v607
        %681 = vmatprep.subr.bf16.mxu0 %v604
        %682 = vmatpush1.bf16.msra.mxu0 %v603
        %683 = vmatprep.subr.bf16.mxu0 0
        %684 = vmatpush2.bf16.msra.mxu0 0
        %685 = vmatprep.subr.bf16.mxu0 0
        %686 = vmatpush2.bf16.msra.mxu0 0
        %687 = vmatprep.subr.bf16.mxu0 0
        %688 = vmatpush2.bf16.msra.mxu0 0
        %689 = vmatprep.subr.bf16.mxu0 0
        %690 = vmatpush2.bf16.msra.mxu0 0
        %691 = vmatprep.subr.bf16.mxu0 0
        %692 = vmatpush2.bf16.msra.mxu0 0
        %693 = vmatprep.subr.bf16.mxu0 0
        %694 = vmatpush2.bf16.msra.mxu0 0
        %695 = vmatprep.subr.bf16.mxu0 0
        %696 = vmatpush2.bf16.msra.mxu0 0
        %697 = vmatprep.subr.bf16.mxu0 0
        %698 = vmatpush2.bf16.msra.mxu0 0
        %699 = vmatprep.mubr.bf16.mxu0 0
        %700 = vmatmul.mubr.bf16.gmra.mxu0 %v474
        %v701 = vpop.f32.mrf.mxu0
        %v702 = vadd.f32 0.0, %v701
        %v703 = vpop.f32.mrf.mxu0
        %v704 = vadd.f32 0.0, %v703
        %v705 = vpop.f32.mrf.mxu0
        %v706 = vpop.f32.mrf.mxu0
        %707 = vdwg.mxu0
        %708 = vmatprep.subr.bf16.mxu0 %v634
        %709 = vmatpush1.bf16.msra.mxu0 %v633
        %710 = vmatprep.subr.bf16.mxu0 %v630
        %711 = vmatpush1.bf16.msra.mxu0 %v629
        %712 = vmatprep.subr.bf16.mxu0 %v626
        %713 = vmatpush1.bf16.msra.mxu0 %v625
        %714 = vmatprep.subr.bf16.mxu0 %v622
        %715 = vmatpush1.bf16.msra.mxu0 %v621
        %716 = vmatprep.subr.bf16.mxu0 %v618
        %717 = vmatpush1.bf16.msra.mxu0 %v617
        %718 = vmatprep.subr.bf16.mxu0 %v614
        %719 = vmatpush1.bf16.msra.mxu0 %v613
        %720 = vmatprep.subr.bf16.mxu0 %v610
        %721 = vmatpush1.bf16.msra.mxu0 %v609
        %722 = vmatprep.subr.bf16.mxu0 %v606
        %723 = vmatpush1.bf16.msra.mxu0 %v605
        %724 = vmatprep.subr.bf16.mxu0 0
        %725 = vmatpush2.bf16.msra.mxu0 0
        %726 = vmatprep.subr.bf16.mxu0 0
        %727 = vmatpush2.bf16.msra.mxu0 0
        %728 = vmatprep.subr.bf16.mxu0 0
        %729 = vmatpush2.bf16.msra.mxu0 0
        %730 = vmatprep.subr.bf16.mxu0 0
        %731 = vmatpush2.bf16.msra.mxu0 0
        %732 = vmatprep.subr.bf16.mxu0 0
        %733 = vmatpush2.bf16.msra.mxu0 0
        %734 = vmatprep.subr.bf16.mxu0 0
        %735 = vmatpush2.bf16.msra.mxu0 0
        %736 = vmatprep.subr.bf16.mxu0 0
        %737 = vmatpush2.bf16.msra.mxu0 0
        %738 = vmatprep.subr.bf16.mxu0 0
        %739 = vmatpush2.bf16.msra.mxu0 0
        %740 = vmatprep.mubr.bf16.mxu0 0
        %741 = vmatmul.mubr.bf16.gmra.mxu0 %v474
        %v742 = vpop.f32.mrf.mxu0
        %v743 = vadd.f32 0.0, %v742
        %v744 = vpop.f32.mrf.mxu0
        %v745 = vadd.f32 0.0, %v744
        %v746 = vpop.f32.mrf.mxu0
        %v747 = vpop.f32.mrf.mxu0
        %748 = vdwg.mxu0
        %v749 = vadd.f32 %v362, %v702
        %v750 = vadd.f32 %v363, %v704
        %v751 = vadd.f32 %v364, %v743
        %v752 = vadd.f32 %v365, %v745
        %v753 = vld [vmem:[%s5] sm:$0xf]
        %v755 = vlaneseq
        %v756 = vshrl.u32 %v755, 7
        %v757 = vsub.s32 0, %v756
        %v758 = vrot.slane %v753, %v757
        %v759 = vlaneseq
        %v760 = vshrl.u32 %v759, 7
        %v761 = vsub.s32 1, %v760
        %v762 = vrot.slane %v753, %v761
        %v763 = vlaneseq
        %v764 = vshrl.u32 %v763, 7
        %v765 = vsub.s32 2, %v764
        %v766 = vrot.slane %v753, %v765
        %v767 = vlaneseq
        %v768 = vshrl.u32 %v767, 7
        %v769 = vsub.s32 3, %v768
        %v770 = vrot.slane %v753, %v769
        %v775 = vadd.f32 %v749, %v758
        %v776 = vadd.f32 %v750, %v762
        %v777 = vadd.f32 %v751, %v766
        %v778 = vadd.f32 %v752, %v770
        %v779 = vxor.u32 %v775, 2147483648
        %v780 = vmul.f32 %v779, 1.442695
        %v781 = vpow.pop %v780
        %v782 = vadd.f32 %v781, 1.0
        %v783 = vrcp.pop %v782
        %v784 = vmul.f32 1.0, %v783
        %v785 = vxor.u32 %v776, 2147483648
        %v786 = vmul.f32 %v785, 1.442695
        %v787 = vpow.pop %v786
        %v788 = vadd.f32 %v787, 1.0
        %v789 = vrcp.pop %v788
        %v790 = vmul.f32 1.0, %v789
        %v791 = vxor.u32 %v777, 2147483648
        %v792 = vmul.f32 %v791, 1.442695
        %v793 = vpow.pop %v792
        %v794 = vadd.f32 %v793, 1.0
        %v795 = vrcp.pop %v794
        %v796 = vmul.f32 1.0, %v795
        %v797 = vtanh.pop %v778
        %v798 = vmul.f32 %v790, %v367
        %v799 = vmul.f32 %v784, %v797
        %v800 = vadd.f32 %v798, %v799
        %v801 = vtanh.pop %v800
        %v802 = vmul.f32 %v796, %v801
        %803 = vst [vmem:[#allocation2] sm:$0xff] %v802
        %804 = vst [vmem:[#allocation3] sm:$0xff] %v800
        %805 = vst [vmem:[%s327] sm:$0xff] %v802
        %806 = vst [vmem:[%s334] sm:$0xff] %v800
        %s807 = sand.u32 %s190, 1
        %s808 = scalar_lea.sflag [#allocation5], %s807
        %s809 = sand.u32 %s190, 1
        %s810 = smul.addr %s809, 8
        %s811 = scalar_lea.vmem [#allocation4], %s810
        %s812 = sand.u32 %s218, 1
        %s813 = scalar_lea.sflag [#allocation7], %s812
        %s814 = sand.u32 %s218, 1
        %s815 = smul.addr %s814, 8
        %s816 = scalar_lea.vmem [#allocation6], %s815
        // Predicated region
        $region49: #{mlstm_forward.3} parent=43 // pred_check
          %p817 = pneg %p200
        $region50: #{mlstm_forward.3} parent=43 // pred_check_branch
          %819 = sbr.rel (%p817) target = $region52
        $region51: #{mlstm_forward.3} parent=43 // pred_region
          %s821 = ssub.s32 128, 128
          %822 = vsyncadd %s808, %s821
          %s823 = sadd.s32 %s29, %s30
          %s824 = smul.addr %s823, 128
          %s825 = scalar_lea.hbm %s6, %s824
          %s827 = sshll.u32 %s811, 4
          %s828 = int_to_ptr.vmem [resolvable:$true] %s827
          %830 = dma.vmem_to_hbm [thread:$0]  %s828, 128, %s825, %s808
        $region52: #{mlstm_forward.3} parent=43 // pred_fallthru
          _
        // Predicated region
        $region53: #{mlstm_forward.3} parent=43 // pred_check
          %p831 = pneg %p228
        $region54: #{mlstm_forward.3} parent=43 // pred_check_branch
          %833 = sbr.rel (%p831) target = $region56
        $region55: #{mlstm_forward.3} parent=43 // pred_region
          %s835 = ssub.s32 128, 128
          %836 = vsyncadd %s813, %s835
          %s837 = sadd.s32 %s29, %s30
          %s838 = smul.addr %s837, 128
          %s839 = scalar_lea.hbm %s7, %s838
          %s841 = sshll.u32 %s816, 4
          %s842 = int_to_ptr.vmem [resolvable:$true] %s841
          %844 = dma.vmem_to_hbm [thread:$0]  %s842, 128, %s839, %s813
        $region56: #{mlstm_forward.3} parent=43 // pred_fallthru
          _
      $region44: #{mlstm_forward.3} parent=5 // pred_fallthru
        _
      %p845 = scmp.le.s32.totalorder 2, %s20
      // Predicated region
      $region57: #{mlstm_forward.3} parent=5 // pred_check
        %p846 = pneg %p845
      $region58: #{mlstm_forward.3} parent=5 // pred_check_branch
        %848 = sbr.rel (%p846) target = $region60
      $region59: #{mlstm_forward.3} parent=5 // pred_region
        %s849 = ssub.s32 %s20, 2
        // Predicated region
        $region61: #{mlstm_forward.3} parent=59 // pred_check
          %p850 = pneg %p206
        $region62: #{mlstm_forward.3} parent=59 // pred_check_branch
          %852 = sbr.rel (%p850) target = $region64
        $region63: #{mlstm_forward.3} parent=59 // pred_region
          %s853 = sand.u32 %s191, 1
          %s854 = scalar_lea.sflag [#allocation5], %s853
          %s855 = sand.u32 %s191, 1
          %s856 = smul.addr %s855, 8
          %s857 = scalar_lea.vmem [#allocation4], %s856
          %858 = dma.done %s854, 128
        $region64: #{mlstm_forward.3} parent=59 // pred_fallthru
          _
        // Predicated region
        $region65: #{mlstm_forward.3} parent=59 // pred_check
          %p859 = pneg %p234
        $region66: #{mlstm_forward.3} parent=59 // pred_check_branch
          %861 = sbr.rel (%p859) target = $region68
        $region67: #{mlstm_forward.3} parent=59 // pred_region
          %s862 = sand.u32 %s219, 1
          %s863 = scalar_lea.sflag [#allocation7], %s862
          %s864 = sand.u32 %s219, 1
          %s865 = smul.addr %s864, 8
          %s866 = scalar_lea.vmem [#allocation6], %s865
          %867 = dma.done %s863, 128
        $region68: #{mlstm_forward.3} parent=59 // pred_fallthru
          _
      $region60: #{mlstm_forward.3} parent=5 // pred_fallthru
        _
    $region6: #{mlstm_forward.3} parent=1 // loop_footer
      %s24 = sadd.s32 1, %s20
    $region7: #{mlstm_forward.3} parent=1 // loop_footer_branch
      %19 = sbr.rel target = $region3
    $region8: #{mlstm_forward.3} parent=1 // loop_exit
      _
    %868 = vsyncpa [#allocation5], 1
    %s869 = scalar_lea.sflag [#allocation5], 1
    %870 = vsyncpa %s869, 1
    %871 = vsyncpa [#allocation7], 1
    %s872 = scalar_lea.sflag [#allocation7], 1
    %873 = vsyncpa %s872, 1

</llo_original>
